<compile_context>
chip_gen: v7x
topology: tpu7x:2x2x1
jax: 0.10.0
libtpu: 0.0.40
codegen_flags: <defaults>
</compile_context>

<pallas_src>
import functools

import jax
import jax.numpy as jnp
from jax.experimental import pallas as pl
from jax.experimental.pallas import tpu as pltpu

LN_EPS = 1e-5


def _round_up(x, m):
    return ((x + m - 1) // m) * m


# ----------------------------------------------------------------------------
# Fused kernel (whole network, weights resident in VMEM)
# ----------------------------------------------------------------------------
def _build_kernel(cfg, has_cond):
    layout = cfg["layout"]
    Hp = cfg["Hp"]
    TB = cfg["TB"]
    hidden = cfg["hidden_dim"]
    L = len(hidden)
    NL = 2 * (L - 1)

    def silu(v):
        # exp and approximate reciprocal both land on the EUP slot.
        return v * pl.reciprocal(1.0 + jnp.exp(-v), approx=True)

    def kernel(*refs):
        if has_cond:
            (x_ref, tp_ref, c_ref, wm_ref, wt1_ref, wc_ref,
             r_ref, rw_ref, o_ref, skip_ref, add_ref) = refs
        else:
            (x_ref, tp_ref, wm_ref, wt1_ref,
             r_ref, rw_ref, o_ref, skip_ref, add_ref) = refs
            c_ref = None
            wc_ref = None

        def row(i):                                  # (1, Hp) f32 broadcast row
            return r_ref[i:i + 1, :]

        def mm(h_f32, wi):                           # bf16 MXU matmul, f32 accum
            return jnp.dot(h_f32.astype(jnp.bfloat16), wm_ref[wi],
                           preferred_element_type=jnp.float32)

        def ln_silu(y, gi, bei, dim):
            # Centered two-pass LayerNorm over the true feature count `dim`.
            # Padded lanes of y are exactly zero (weight cols / bias padded
            # with zeros), so the plain lane-sum is the sum over real lanes;
            # the mask keeps padded lanes out of the variance and keeps them
            # exactly zero afterwards.
            lane = jax.lax.broadcasted_iota(jnp.int32, (1, Hp), 1)
            mask = lane < dim
            inv_d = 1.0 / float(dim)
            mean = jnp.sum(y, axis=-1, keepdims=True) * inv_d
            d = jnp.where(mask, y - mean, 0.0)
            var = jnp.sum(d * d, axis=-1, keepdims=True) * inv_d
            yn = d * jax.lax.rsqrt(var + LN_EPS)
            yn = yn * row(gi) + row(bei)             # gamma/beta zero in pads
            return silu(yn)

        # ---- time / cond embeddings for ALL 2*(L-1) layers, up front -------
        # One wide matmul each for the time-MLP first linears and the cond
        # linears, then per-layer second linears; results parked in VMEM
        # scratch so the serial layer chain never waits on them.
        tp = tp_ref[...]                             # (TB, Tp) f32, pads zero
        h1 = jnp.dot(tp.astype(jnp.bfloat16), wt1_ref[...],
                     preferred_element_type=jnp.float32) + rw_ref[0:1, :]
        h1 = silu(h1)                                # (TB, NL*Hp)
        if has_cond:
            ce = jnp.dot(c_ref[...].astype(jnp.bfloat16), wc_ref[...],
                         preferred_element_type=jnp.float32) + rw_ref[1:2, :]

        for n in range(NL):
            w2i, b2i = layout["time2"][n]
            te = mm(h1[:, n * Hp:(n + 1) * Hp], w2i) + row(b2i)
            if has_cond:
                te = te + ce[:, n * Hp:(n + 1) * Hp]
            add_ref[n] = te

        # ---- input layer ----------------------------------------------------
        wi, bi, gi, bei, dim = layout["input"]
        xcur = ln_silu(mm(x_ref[...], wi) + row(bi), gi, bei, dim)

        # ---- encoder ---------------------------------------------------------
        for i in range(L - 1):
            skip_ref[i] = xcur                       # stash skip in VMEM
            wi, bi, gi, bei, dim = layout["enc"][i]
            xcur = ln_silu(mm(xcur + add_ref[i], wi) + row(bi), gi, bei, dim)

        # ---- decoder (residual added AFTER the block, as in PyTorch) --------
        for jd in range(L - 1):
            wi, bi, gi, bei, dim = layout["dec"][jd]
            xcur = ln_silu(mm(xcur + add_ref[(L - 1) + jd], wi) + row(bi),
                           gi, bei, dim)
            xcur = xcur + skip_ref[L - 2 - jd]

        # ---- output layer ----------------------------------------------------
        wo, bo = layout["output"]
        o_ref[...] = mm(xcur, wo) + row(bo)

    return kernel


# ----------------------------------------------------------------------------
# Glue: sinusoidal time projection (diffusers Timesteps(dim, True, 0))
# ----------------------------------------------------------------------------
def sinusoidal_timesteps(t, dim, flip_sin_to_cos=True, downscale_freq_shift=0.0,
                         max_period=10000.0):
    half = dim // 2
    exponent = -jnp.log(max_period) * jnp.arange(half, dtype=jnp.float32)
    exponent = exponent / (half - downscale_freq_shift)
    freqs = jnp.exp(exponent)
    emb = t.astype(jnp.float32)[:, None] * freqs[None, :]
    sin, cos = jnp.sin(emb), jnp.cos(emb)
    if flip_sin_to_cos:
        return jnp.concatenate([cos, sin], axis=-1)
    return jnp.concatenate([sin, cos], axis=-1)


# ----------------------------------------------------------------------------
# Parameters (PyTorch-style init, weights pre-transposed to (in, out))
# ----------------------------------------------------------------------------
def init_linear(key, fan_in, fan_out):
    kw, kb = jax.random.split(key)
    bound = 1.0 / jnp.sqrt(jnp.float32(fan_in))
    w = jax.random.uniform(kw, (fan_in, fan_out), jnp.float32, -bound, bound)
    b = jax.random.uniform(kb, (fan_out,), jnp.float32, -bound, bound)
    return w, b


def init_params(key, embed_dim, cond_dim, hidden_dim, time_embed_dim):
    L = len(hidden_dim)
    keys = iter(jax.random.split(key, 2 + 8 * (L - 1)))

    def ln(dim):
        return jnp.ones((dim,), jnp.float32), jnp.zeros((dim,), jnp.float32)

    params = {
        "embed_dim": embed_dim,
        "cond_dim": cond_dim,
        "hidden_dim": list(hidden_dim),
        "time_embed_dim": time_embed_dim,
    }

    w, b = init_linear(next(keys), embed_dim, hidden_dim[0])
    params["input_layer"] = (w, b, *ln(hidden_dim[0]))

    enc_time, enc_cond, enc_layer = [], [], []
    for i in range(L - 1):
        w1, b1 = init_linear(next(keys), time_embed_dim, hidden_dim[i])
        w2, b2 = init_linear(next(keys), hidden_dim[i], hidden_dim[i])
        enc_time.append((w1, b1, w2, b2))
        enc_cond.append(init_linear(next(keys), cond_dim, hidden_dim[i]))
        w, b = init_linear(next(keys), hidden_dim[i], hidden_dim[i + 1])
        enc_layer.append((w, b, *ln(hidden_dim[i + 1])))
    params["enc_time"], params["enc_cond"], params["enc_layer"] = (
        enc_time, enc_cond, enc_layer)

    dec_time, dec_cond, dec_layer = [], [], []
    for i in range(L - 1, 0, -1):
        w1, b1 = init_linear(next(keys), time_embed_dim, hidden_dim[i])
        w2, b2 = init_linear(next(keys), hidden_dim[i], hidden_dim[i])
        dec_time.append((w1, b1, w2, b2))
        dec_cond.append(init_linear(next(keys), cond_dim, hidden_dim[i]))
        w, b = init_linear(next(keys), hidden_dim[i], hidden_dim[i - 1])
        dec_layer.append((w, b, *ln(hidden_dim[i - 1])))
    params["dec_time"], params["dec_cond"], params["dec_layer"] = (
        dec_time, dec_cond, dec_layer)

    params["output_layer"] = init_linear(next(keys), hidden_dim[0], embed_dim)
    return params


def pack_params(params, lane_multiple=128):
    """Pack weights by shape class (main H->H, time T->H wide, cond C->H wide)
    into bf16 stacks plus one dense f32 row array.  `lane_multiple=256` is
    recommended on v6e/v7x when production feature dims are >= 256."""
    embed_dim = params["embed_dim"]
    cond_dim = params["cond_dim"]
    hidden_dim = list(params["hidden_dim"])
    ted = params["time_embed_dim"]
    L = len(hidden_dim)
    NL = 2 * (L - 1)

    Hp = _round_up(max([embed_dim] + hidden_dim), lane_multiple)
    Tp = _round_up(ted, lane_multiple)
    Cp = _round_up(cond_dim, lane_multiple)
    Wwide = NL * Hp

    main_mats, rows = [], []

    def add_main(w):
        # Padded rows AND columns are zero (keeps padded lanes exactly zero).
        m = jnp.zeros((Hp, Hp), jnp.float32).at[:w.shape[0], :w.shape[1]].set(w)
        main_mats.append(m)
        return len(main_mats) - 1

    def add_row(r):
        # Pad lanes MUST stay zero (bias/gamma/beta) for the LayerNorm
        # padded-lane invariant.
        v = jnp.zeros((Hp,), jnp.float32).at[:r.shape[0]].set(r)
        rows.append(v)
        return len(rows) - 1

    w_time1 = jnp.zeros((Tp, Wwide), jnp.float32)
    w_cond = jnp.zeros((Cp, Wwide), jnp.float32)
    rw = jnp.zeros((8, Wwide), jnp.float32)   # row 0: time1 biases, row 1: cond

    layout = {"time2": [], "enc": [], "dec": []}

    w, b, g, be = params["input_layer"]
    layout["input"] = (add_main(w), add_row(b), add_row(g), add_row(be),
                       hidden_dim[0])

    time_list = list(params["enc_time"]) + list(params["dec_time"])
    cond_list = list(params["enc_cond"]) + list(params["dec_cond"])
    for n in range(NL):
        w1, b1, w2, b2 = time_list[n]
        lo = n * Hp
        w_time1 = w_time1.at[:w1.shape[0], lo:lo + w1.shape[1]].set(w1)
        rw = rw.at[0, lo:lo + b1.shape[0]].set(b1)
        wc, bc = cond_list[n]
        w_cond = w_cond.at[:wc.shape[0], lo:lo + wc.shape[1]].set(wc)
        rw = rw.at[1, lo:lo + bc.shape[0]].set(bc)
        layout["time2"].append((add_main(w2), add_row(b2)))

    for i in range(L - 1):
        w, b, g, be = params["enc_layer"][i]
        layout["enc"].append((add_main(w), add_row(b), add_row(g), add_row(be),
                              hidden_dim[i + 1]))
    for jd in range(L - 1):
        w, b, g, be = params["dec_layer"][jd]
        layout["dec"].append((add_main(w), add_row(b), add_row(g), add_row(be),
                              hidden_dim[L - 2 - jd]))

    wo, bo = params["output_layer"]
    layout["output"] = (add_main(wo), add_row(bo))

    NR = len(rows)
    NRp = _round_up(NR, 8)
    R = jnp.zeros((NRp, Hp), jnp.float32).at[:NR].set(jnp.stack(rows))

    return {
        "W_main": jnp.stack(main_mats).astype(jnp.bfloat16),  # (NWm, Hp, Hp)
        "W_time1": w_time1.astype(jnp.bfloat16),               # (Tp, NL*Hp)
        "W_cond": w_cond.astype(jnp.bfloat16),                 # (Cp, NL*Hp)
        "R": R,                                                # (NRp, Hp) f32
        "RW": rw,                                              # (8, NL*Hp) f32
        "layout": layout,
        "Hp": Hp, "Tp": Tp, "Cp": Cp, "NL": NL,
        "embed_dim": embed_dim, "cond_dim": cond_dim,
        "hidden_dim": hidden_dim, "time_embed_dim": ted,
    }


# ----------------------------------------------------------------------------
# Forward pass: one fused pallas_call with a parallel batch grid
# ----------------------------------------------------------------------------
def diffusion_prior_unet_forward(packed, x, t, c=None):
    Hp, Tp, Cp = packed["Hp"], packed["Tp"], packed["Cp"]
    NL = packed["NL"]
    embed_dim = packed["embed_dim"]
    hidden_dim = packed["hidden_dim"]
    L = len(hidden_dim)
    has_cond = c is not None

    B = x.shape[0]
    Bp = _round_up(B, 8)
    TB = Bp if Bp <= 128 else 128          # batch tile; re-derive per gen for
    Bp = _round_up(Bp, TB)                 # production (v7x: fit 64 MiB VMEM)
    nb = Bp // TB

    tproj = sinusoidal_timesteps(t, packed["time_embed_dim"])

    def pad2(a, lanes):
        out = jnp.zeros((Bp, lanes), jnp.float32)
        return out.at[:a.shape[0], :a.shape[1]].set(a.astype(jnp.float32))

    inputs = [pad2(x, Hp), pad2(tproj, Tp)]
    in_specs = [pl.BlockSpec((TB, Hp), lambda i: (i, 0)),
                pl.BlockSpec((TB, Tp), lambda i: (i, 0))]
    if has_cond:
        inputs.append(pad2(c, Cp))
        in_specs.append(pl.BlockSpec((TB, Cp), lambda i: (i, 0)))

    W_main, W_time1 = packed["W_main"], packed["W_time1"]
    W_cond, R, RW = packed["W_cond"], packed["R"], packed["RW"]

    # Weights: whole-array blocks with constant index maps -> resident in VMEM
    # across all batch-grid iterations (no re-DMA).
    inputs.append(W_main)
    in_specs.append(pl.BlockSpec(W_main.shape, lambda i: (0, 0, 0)))
    inputs.append(W_time1)
    in_specs.append(pl.BlockSpec(W_time1.shape, lambda i: (0, 0)))
    if has_cond:
        inputs.append(W_cond)
        in_specs.append(pl.BlockSpec(W_cond.shape, lambda i: (0, 0)))
    inputs.append(R)
    in_specs.append(pl.BlockSpec(R.shape, lambda i: (0, 0)))
    inputs.append(RW)
    in_specs.append(pl.BlockSpec(RW.shape, lambda i: (0, 0)))

    cfg = {"layout": packed["layout"], "Hp": Hp, "TB": TB,
           "hidden_dim": hidden_dim}
    kernel = _build_kernel(cfg, has_cond)

    # Explicit VMEM budget sized from the packed arrays (+ activations, skips,
    # double-buffering and headroom), clamped to a safe range.
    weight_bytes = sum(int(a.size) * a.dtype.itemsize
                       for a in (W_main, W_time1, W_cond, R, RW))
    act_bytes = 2 * 2 * TB * (Hp + Tp + Cp) * 4      # in/out, double-buffered
    scratch_bytes = (L - 1 + NL) * TB * Hp * 4
    est = 2 * weight_bytes + act_bytes + scratch_bytes + (8 << 20)
    vmem_limit = int(min(100 << 20, max(32 << 20, est)))

    out = pl.pallas_call(
        kernel,
        out_shape=jax.ShapeDtypeStruct((Bp, Hp), jnp.float32),
        grid=(nb,),
        in_specs=in_specs,
        out_specs=pl.BlockSpec((TB, Hp), lambda i: (i, 0)),
        scratch_shapes=[pltpu.VMEM((L - 1, TB, Hp), jnp.float32),   # skips
                        pltpu.VMEM((NL, TB, Hp), jnp.float32)],     # t/c embs
        compiler_params=pltpu.CompilerParams(
            dimension_semantics=("parallel",),
            vmem_limit_bytes=vmem_limit),
    )(*inputs)
    return out[:B, :embed_dim]


# ----------------------------------------------------------------------------
# Pure-JAX reference (weights rounded to bf16 to mirror the kernel's storage)
# ----------------------------------------------------------------------------
def _ref_forward(params, x, t, c=None):
    hd = params["hidden_dim"]
    L = len(hd)

    def q(w):
        return w.astype(jnp.bfloat16).astype(jnp.float32)

    def lin(h, w, b):
        return h @ q(w) + b

    def block(h, w, b, g, be):
        y = lin(h, w, b)
        mu = y.mean(-1, keepdims=True)
        var = ((y - mu) ** 2).mean(-1, keepdims=True)
        y = (y - mu) / jnp.sqrt(var + LN_EPS) * g + be
        return y * jax.nn.sigmoid(y)

    def temb(tp, w1, b1, w2, b2):
        h = lin(tp, w1, b1)
        h = h * jax.nn.sigmoid(h)
        return lin(h, w2, b2)

    tp = sinusoidal_timesteps(t, params["time_embed_dim"])
    x = block(x, *params["input_layer"])
    hidden = []
    for i in range(L - 1):
        hidden.append(x)
        x = x + temb(tp, *params["enc_time"][i])
        if c is not None:
            x = x + lin(c, *params["enc_cond"][i])
        x = block(x, *params["enc_layer"][i])
    for j in range(L - 1):
        x = x + temb(tp, *params["dec_time"][j])
        if c is not None:
            x = x + lin(c, *params["dec_cond"][j])
        x = block(x, *params["dec_layer"][j])
        x = x + hidden[-1 - j]
    return lin(x, *params["output_layer"])


# ----------------------------------------------------------------------------
if __name__ == "__main__":
    # Small shapes consistent with the module's forward semantics.
    B = 2
    embed_dim = 64
    cond_dim = 16
    hidden_dim = [64, 32, 16]
    time_embed_dim = 32

    root = jax.random.PRNGKey(0)
    kp, kx, kt, kc = jax.random.split(root, 4)

    params = init_params(kp, embed_dim, cond_dim, hidden_dim, time_embed_dim)
    packed = pack_params(params)

    x = jax.random.normal(kx, (B, embed_dim), jnp.float32)
    t = jax.random.randint(kt, (B,), 0, 1000)
    c = jax.random.normal(kc, (B, cond_dim), jnp.float32)

    fwd = jax.jit(functools.partial(diffusion_prior_unet_forward, packed))

    # Conditional path.
    out = jax.block_until_ready(fwd(x, t, c))
    ref = _ref_forward(params, x, t, c)
    assert out.shape == (B, embed_dim), out.shape
    assert jnp.allclose(out, ref, atol=5e-2, rtol=5e-2), "mismatch (cond path)"

    # Unconditional path (c=None builds a kernel variant without a cond ref).
    out_nc = jax.block_until_ready(fwd(x, t))
    ref_nc = _ref_forward(params, x, t, None)
    assert jnp.allclose(out_nc, ref_nc, atol=5e-2, rtol=5e-2), \
        "mismatch (no-cond path)"

    print("KERNEL_OK")
</pallas_src>

<mosaic_0001>
module attributes {stable_mosaic.version = 11 : i64} {
  func.func @kernel(%arg0: i32, %arg1: memref<8x128xf32, #tpu.memory_space<vmem>>, %arg2: memref<8x128xf32, #tpu.memory_space<vmem>>, %arg3: memref<8x128xf32, #tpu.memory_space<vmem>>, %arg4: memref<10x128x128xbf16, #tpu.memory_space<vmem>>, %arg5: memref<128x512xbf16, #tpu.memory_space<vmem>>, %arg6: memref<128x512xbf16, #tpu.memory_space<vmem>>, %arg7: memref<24x128xf32, #tpu.memory_space<vmem>>, %arg8: memref<8x512xf32, #tpu.memory_space<vmem>>, %arg9: memref<8x128xf32, #tpu.memory_space<vmem>>, %arg10: memref<2x8x128xf32, #tpu.memory_space<vmem>>, %arg11: memref<4x8x128xf32, #tpu.memory_space<vmem>>) attributes {dimension_semantics = [#tpu.dimension_semantics<parallel>], iteration_bounds = array<i64: 1>, scalar_prefetch = 0 : i64, scratch_operands = 2 : i64, tpu.core_type = #tpu.core_type<tc>, window_params = [{transform_indices = @transform_0, window_bounds = array<i64: 8, 128>}, {transform_indices = @transform_1, window_bounds = array<i64: 8, 128>}, {transform_indices = @transform_2, window_bounds = array<i64: 8, 128>}, {pipeline_mode = #tpu.pipeline_mode<synchronous>, transform_indices = @transform_3, window_bounds = array<i64: 10, 128, 128>}, {pipeline_mode = #tpu.pipeline_mode<synchronous>, transform_indices = @transform_4, window_bounds = array<i64: 128, 512>}, {pipeline_mode = #tpu.pipeline_mode<synchronous>, transform_indices = @transform_5, window_bounds = array<i64: 128, 512>}, {pipeline_mode = #tpu.pipeline_mode<synchronous>, transform_indices = @transform_6, window_bounds = array<i64: 24, 128>}, {pipeline_mode = #tpu.pipeline_mode<synchronous>, transform_indices = @transform_7, window_bounds = array<i64: 8, 512>}, {transform_indices = @transform_8, window_bounds = array<i64: 8, 128>}]} {
    %c0 = arith.constant 0 : index
    %c0_0 = arith.constant 0 : index
    %0 = vector.load %arg2[%c0, %c0_0] : memref<8x128xf32, #tpu.memory_space<vmem>>, vector<8x128xf32>
    %1 = arith.truncf %0 : vector<8x128xf32> to vector<8x128xbf16>
    %c0_1 = arith.constant 0 : index
    %c0_2 = arith.constant 0 : index
    %2 = vector.load %arg5[%c0_1, %c0_2] : memref<128x512xbf16, #tpu.memory_space<vmem>>, vector<128x512xbf16>
    %cst = arith.constant dense<0.000000e+00> : vector<8x512xf32>
    %3 = tpu.matmul %1, %2, %cst {dimension_numbers = #tpu.dot_dimension_numbers<[1], [0], [0], [1], [0, 0, 1, 1], [], []>} : vector<8x128xbf16>, vector<128x512xbf16>, vector<8x512xf32> -> vector<8x512xf32>
    %c0_3 = arith.constant 0 : index
    %c0_4 = arith.constant 0 : index
    %4 = vector.load %arg8[%c0_3, %c0_4] : memref<8x512xf32, #tpu.memory_space<vmem>>, vector<1x512xf32>
    %5 = vector.broadcast %4 : vector<1x512xf32> to vector<8x512xf32>
    %6 = arith.addf %3, %5 : vector<8x512xf32>
    %cst_5 = arith.constant 0.000000e+00 : f32
    %7 = vector.broadcast %cst_5 : f32 to vector<8x512xf32>
    %8 = arith.subf %7, %6 : vector<8x512xf32>
    %9 = math.exp %8 : vector<8x512xf32>
    %cst_6 = arith.constant 1.000000e+00 : f32
    %10 = vector.broadcast %cst_6 : f32 to vector<8x512xf32>
    %11 = arith.addf %10, %9 : vector<8x512xf32>
    %12 = tpu.reciprocal %11 {approx = true} : vector<8x512xf32> -> vector<8x512xf32>
    %13 = arith.mulf %6, %12 : vector<8x512xf32>
    %c0_7 = arith.constant 0 : index
    %c0_8 = arith.constant 0 : index
    %14 = vector.load %arg3[%c0_7, %c0_8] : memref<8x128xf32, #tpu.memory_space<vmem>>, vector<8x128xf32>
    %15 = arith.truncf %14 : vector<8x128xf32> to vector<8x128xbf16>
    %c0_9 = arith.constant 0 : index
    %c0_10 = arith.constant 0 : index
    %16 = vector.load %arg6[%c0_9, %c0_10] : memref<128x512xbf16, #tpu.memory_space<vmem>>, vector<128x512xbf16>
    %cst_11 = arith.constant dense<0.000000e+00> : vector<8x512xf32>
    %17 = tpu.matmul %15, %16, %cst_11 {dimension_numbers = #tpu.dot_dimension_numbers<[1], [0], [0], [1], [0, 0, 1, 1], [], []>} : vector<8x128xbf16>, vector<128x512xbf16>, vector<8x512xf32> -> vector<8x512xf32>
    %c1 = arith.constant 1 : index
    %c0_12 = arith.constant 0 : index
    %18 = vector.load %arg8[%c1, %c0_12] : memref<8x512xf32, #tpu.memory_space<vmem>>, vector<1x512xf32>
    %19 = vector.broadcast %18 : vector<1x512xf32> to vector<8x512xf32>
    %20 = arith.addf %17, %19 : vector<8x512xf32>
    %21 = vector.extract_strided_slice %13 {offsets = [0, 0], sizes = [8, 128], strides = [1, 1]} : vector<8x512xf32> to vector<8x128xf32>
    %22 = arith.truncf %21 : vector<8x128xf32> to vector<8x128xbf16>
    %c1_13 = arith.constant 1 : index
    %c0_14 = arith.constant 0 : index
    %c0_15 = arith.constant 0 : index
    %23 = vector.load %arg4[%c1_13, %c0_14, %c0_15] : memref<10x128x128xbf16, #tpu.memory_space<vmem>>, vector<1x128x128xbf16>
    %24 = vector.shape_cast %23 : vector<1x128x128xbf16> to vector<128x128xbf16>
    %cst_16 = arith.constant dense<0.000000e+00> : vector<8x128xf32>
    %25 = tpu.matmul %22, %24, %cst_16 {dimension_numbers = #tpu.dot_dimension_numbers<[1], [0], [0], [1], [0, 0, 1, 1], [], []>} : vector<8x128xbf16>, vector<128x128xbf16>, vector<8x128xf32> -> vector<8x128xf32>
    %c3 = arith.constant 3 : index
    %c0_17 = arith.constant 0 : index
    %26 = vector.load %arg7[%c3, %c0_17] : memref<24x128xf32, #tpu.memory_space<vmem>>, vector<1x128xf32>
    %27 = vector.broadcast %26 : vector<1x128xf32> to vector<8x128xf32>
    %28 = arith.addf %25, %27 : vector<8x128xf32>
    %29 = vector.extract_strided_slice %20 {offsets = [0, 0], sizes = [8, 128], strides = [1, 1]} : vector<8x512xf32> to vector<8x128xf32>
    %30 = arith.addf %28, %29 : vector<8x128xf32>
    %c0_18 = arith.constant 0 : index
    %c0_19 = arith.constant 0 : index
    %c0_20 = arith.constant 0 : index
    %31 = vector.load %arg11[%c0_18, %c0_19, %c0_20] : memref<4x8x128xf32, #tpu.memory_space<vmem>>, vector<1x8x128xf32>
    %32 = vector.shape_cast %31 : vector<1x8x128xf32> to vector<8x128xf32>
    %33 = vector.shape_cast %30 : vector<8x128xf32> to vector<1x8x128xf32>
    tpu.vector_store %arg11[%c0_18, %c0_19, %c0_20], %33 {strides = array<i32>} : memref<4x8x128xf32, #tpu.memory_space<vmem>>, vector<1x8x128xf32>,
    %34 = vector.extract_strided_slice %13 {offsets = [0, 128], sizes = [8, 128], strides = [1, 1]} : vector<8x512xf32> to vector<8x128xf32>
    %35 = arith.truncf %34 : vector<8x128xf32> to vector<8x128xbf16>
    %c2 = arith.constant 2 : index
    %c0_21 = arith.constant 0 : index
    %c0_22 = arith.constant 0 : index
    %36 = vector.load %arg4[%c2, %c0_21, %c0_22] : memref<10x128x128xbf16, #tpu.memory_space<vmem>>, vector<1x128x128xbf16>
    %37 = vector.shape_cast %36 : vector<1x128x128xbf16> to vector<128x128xbf16>
    %cst_23 = arith.constant dense<0.000000e+00> : vector<8x128xf32>
    %38 = tpu.matmul %35, %37, %cst_23 {dimension_numbers = #tpu.dot_dimension_numbers<[1], [0], [0], [1], [0, 0, 1, 1], [], []>} : vector<8x128xbf16>, vector<128x128xbf16>, vector<8x128xf32> -> vector<8x128xf32>
    %c4 = arith.constant 4 : index
    %c0_24 = arith.constant 0 : index
    %39 = vector.load %arg7[%c4, %c0_24] : memref<24x128xf32, #tpu.memory_space<vmem>>, vector<1x128xf32>
    %40 = vector.broadcast %39 : vector<1x128xf32> to vector<8x128xf32>
    %41 = arith.addf %38, %40 : vector<8x128xf32>
    %42 = vector.extract_strided_slice %20 {offsets = [0, 128], sizes = [8, 128], strides = [1, 1]} : vector<8x512xf32> to vector<8x128xf32>
    %43 = arith.addf %41, %42 : vector<8x128xf32>
    %c1_25 = arith.constant 1 : index
    %c0_26 = arith.constant 0 : index
    %c0_27 = arith.constant 0 : index
    %44 = vector.load %arg11[%c1_25, %c0_26, %c0_27] : memref<4x8x128xf32, #tpu.memory_space<vmem>>, vector<1x8x128xf32>
    %45 = vector.shape_cast %44 : vector<1x8x128xf32> to vector<8x128xf32>
    %46 = vector.shape_cast %43 : vector<8x128xf32> to vector<1x8x128xf32>
    tpu.vector_store %arg11[%c1_25, %c0_26, %c0_27], %46 {strides = array<i32>} : memref<4x8x128xf32, #tpu.memory_space<vmem>>, vector<1x8x128xf32>,
    %47 = vector.extract_strided_slice %13 {offsets = [0, 256], sizes = [8, 128], strides = [1, 1]} : vector<8x512xf32> to vector<8x128xf32>
    %48 = arith.truncf %47 : vector<8x128xf32> to vector<8x128xbf16>
    %c3_28 = arith.constant 3 : index
    %c0_29 = arith.constant 0 : index
    %c0_30 = arith.constant 0 : index
    %49 = vector.load %arg4[%c3_28, %c0_29, %c0_30] : memref<10x128x128xbf16, #tpu.memory_space<vmem>>, vector<1x128x128xbf16>
    %50 = vector.shape_cast %49 : vector<1x128x128xbf16> to vector<128x128xbf16>
    %cst_31 = arith.constant dense<0.000000e+00> : vector<8x128xf32>
    %51 = tpu.matmul %48, %50, %cst_31 {dimension_numbers = #tpu.dot_dimension_numbers<[1], [0], [0], [1], [0, 0, 1, 1], [], []>} : vector<8x128xbf16>, vector<128x128xbf16>, vector<8x128xf32> -> vector<8x128xf32>
    %c5 = arith.constant 5 : index
    %c0_32 = arith.constant 0 : index
    %52 = vector.load %arg7[%c5, %c0_32] : memref<24x128xf32, #tpu.memory_space<vmem>>, vector<1x128xf32>
    %53 = vector.broadcast %52 : vector<1x128xf32> to vector<8x128xf32>
    %54 = arith.addf %51, %53 : vector<8x128xf32>
    %55 = vector.extract_strided_slice %20 {offsets = [0, 256], sizes = [8, 128], strides = [1, 1]} : vector<8x512xf32> to vector<8x128xf32>
    %56 = arith.addf %54, %55 : vector<8x128xf32>
    %c2_33 = arith.constant 2 : index
    %c0_34 = arith.constant 0 : index
    %c0_35 = arith.constant 0 : index
    %57 = vector.load %arg11[%c2_33, %c0_34, %c0_35] : memref<4x8x128xf32, #tpu.memory_space<vmem>>, vector<1x8x128xf32>
    %58 = vector.shape_cast %57 : vector<1x8x128xf32> to vector<8x128xf32>
    %59 = vector.shape_cast %56 : vector<8x128xf32> to vector<1x8x128xf32>
    tpu.vector_store %arg11[%c2_33, %c0_34, %c0_35], %59 {strides = array<i32>} : memref<4x8x128xf32, #tpu.memory_space<vmem>>, vector<1x8x128xf32>,
    %60 = vector.extract_strided_slice %13 {offsets = [0, 384], sizes = [8, 128], strides = [1, 1]} : vector<8x512xf32> to vector<8x128xf32>
    %61 = arith.truncf %60 : vector<8x128xf32> to vector<8x128xbf16>
    %c4_36 = arith.constant 4 : index
    %c0_37 = arith.constant 0 : index
    %c0_38 = arith.constant 0 : index
    %62 = vector.load %arg4[%c4_36, %c0_37, %c0_38] : memref<10x128x128xbf16, #tpu.memory_space<vmem>>, vector<1x128x128xbf16>
    %63 = vector.shape_cast %62 : vector<1x128x128xbf16> to vector<128x128xbf16>
    %cst_39 = arith.constant dense<0.000000e+00> : vector<8x128xf32>
    %64 = tpu.matmul %61, %63, %cst_39 {dimension_numbers = #tpu.dot_dimension_numbers<[1], [0], [0], [1], [0, 0, 1, 1], [], []>} : vector<8x128xbf16>, vector<128x128xbf16>, vector<8x128xf32> -> vector<8x128xf32>
    %c6 = arith.constant 6 : index
    %c0_40 = arith.constant 0 : index
    %65 = vector.load %arg7[%c6, %c0_40] : memref<24x128xf32, #tpu.memory_space<vmem>>, vector<1x128xf32>
    %66 = vector.broadcast %65 : vector<1x128xf32> to vector<8x128xf32>
    %67 = arith.addf %64, %66 : vector<8x128xf32>
    %68 = vector.extract_strided_slice %20 {offsets = [0, 384], sizes = [8, 128], strides = [1, 1]} : vector<8x512xf32> to vector<8x128xf32>
    %69 = arith.addf %67, %68 : vector<8x128xf32>
    %c3_41 = arith.constant 3 : index
    %c0_42 = arith.constant 0 : index
    %c0_43 = arith.constant 0 : index
    %70 = vector.load %arg11[%c3_41, %c0_42, %c0_43] : memref<4x8x128xf32, #tpu.memory_space<vmem>>, vector<1x8x128xf32>
    %71 = vector.shape_cast %70 : vector<1x8x128xf32> to vector<8x128xf32>
    %72 = vector.shape_cast %69 : vector<8x128xf32> to vector<1x8x128xf32>
    tpu.vector_store %arg11[%c3_41, %c0_42, %c0_43], %72 {strides = array<i32>} : memref<4x8x128xf32, #tpu.memory_space<vmem>>, vector<1x8x128xf32>,
    %c0_44 = arith.constant 0 : index
    %c0_45 = arith.constant 0 : index
    %73 = vector.load %arg1[%c0_44, %c0_45] : memref<8x128xf32, #tpu.memory_space<vmem>>, vector<8x128xf32>
    %74 = arith.truncf %73 : vector<8x128xf32> to vector<8x128xbf16>
    %c0_46 = arith.constant 0 : index
    %c0_47 = arith.constant 0 : index
    %c0_48 = arith.constant 0 : index
    %75 = vector.load %arg4[%c0_46, %c0_47, %c0_48] : memref<10x128x128xbf16, #tpu.memory_space<vmem>>, vector<1x128x128xbf16>
    %76 = vector.shape_cast %75 : vector<1x128x128xbf16> to vector<128x128xbf16>
    %cst_49 = arith.constant dense<0.000000e+00> : vector<8x128xf32>
    %77 = tpu.matmul %74, %76, %cst_49 {dimension_numbers = #tpu.dot_dimension_numbers<[1], [0], [0], [1], [0, 0, 1, 1], [], []>} : vector<8x128xbf16>, vector<128x128xbf16>, vector<8x128xf32> -> vector<8x128xf32>
    %c0_50 = arith.constant 0 : index
    %c0_51 = arith.constant 0 : index
    %78 = vector.load %arg7[%c0_50, %c0_51] : memref<24x128xf32, #tpu.memory_space<vmem>>, vector<1x128xf32>
    %79 = vector.broadcast %78 : vector<1x128xf32> to vector<8x128xf32>
    %80 = arith.addf %77, %79 : vector<8x128xf32>
    %81 = tpu.iota {dimensions = array<i32: 1>} : vector<1x128xi32>
    %c64_i32 = arith.constant 64 : i32
    %82 = vector.broadcast %c64_i32 : i32 to vector<1x128xi32>
    %83 = arith.cmpi slt, %81, %82 : vector<1x128xi32>
    %cst_52 = arith.constant dense<0.000000e+00> : vector<8xf32>
    %84 = vector.multi_reduction <add>, %80, %cst_52 [1] : vector<8x128xf32> to vector<8xf32>
    %85 = vector.shape_cast %84 : vector<8xf32> to vector<8x1xf32>
    %cst_53 = arith.constant 1.562500e-02 : f32
    %86 = vector.broadcast %cst_53 : f32 to vector<8x1xf32>
    %87 = arith.mulf %85, %86 : vector<8x1xf32>
    %88 = vector.broadcast %87 : vector<8x1xf32> to vector<8x128xf32>
    %89 = arith.subf %80, %88 : vector<8x128xf32>
    %cst_54 = arith.constant 0.000000e+00 : f32
    %90 = vector.shape_cast %83 : vector<1x128xi1> to vector<1x128xi1>
    %91 = vector.broadcast %90 : vector<1x128xi1> to vector<8x128xi1>
    %92 = vector.broadcast %cst_54 : f32 to vector<8x128xf32>
    %93 = arith.select %91, %89, %92 : vector<8x128xi1>, vector<8x128xf32>
    %94 = arith.mulf %93, %93 : vector<8x128xf32>
    %cst_55 = arith.constant dense<0.000000e+00> : vector<8xf32>
    %95 = vector.multi_reduction <add>, %94, %cst_55 [1] : vector<8x128xf32> to vector<8xf32>
    %96 = vector.shape_cast %95 : vector<8xf32> to vector<8x1xf32>
    %cst_56 = arith.constant 1.562500e-02 : f32
    %97 = vector.broadcast %cst_56 : f32 to vector<8x1xf32>
    %98 = arith.mulf %96, %97 : vector<8x1xf32>
    %cst_57 = arith.constant 9.99999974E-6 : f32
    %99 = vector.broadcast %cst_57 : f32 to vector<8x1xf32>
    %100 = arith.addf %98, %99 : vector<8x1xf32>
    %101 = math.rsqrt %100 : vector<8x1xf32>
    %102 = vector.broadcast %101 : vector<8x1xf32> to vector<8x128xf32>
    %103 = arith.mulf %93, %102 : vector<8x128xf32>
    %c1_58 = arith.constant 1 : index
    %c0_59 = arith.constant 0 : index
    %104 = vector.load %arg7[%c1_58, %c0_59] : memref<24x128xf32, #tpu.memory_space<vmem>>, vector<1x128xf32>
    %105 = vector.broadcast %104 : vector<1x128xf32> to vector<8x128xf32>
    %106 = arith.mulf %103, %105 : vector<8x128xf32>
    %c2_60 = arith.constant 2 : index
    %c0_61 = arith.constant 0 : index
    %107 = vector.load %arg7[%c2_60, %c0_61] : memref<24x128xf32, #tpu.memory_space<vmem>>, vector<1x128xf32>
    %108 = vector.broadcast %107 : vector<1x128xf32> to vector<8x128xf32>
    %109 = arith.addf %106, %108 : vector<8x128xf32>
    %cst_62 = arith.constant 0.000000e+00 : f32
    %110 = vector.broadcast %cst_62 : f32 to vector<8x128xf32>
    %111 = arith.subf %110, %109 : vector<8x128xf32>
    %112 = math.exp %111 : vector<8x128xf32>
    %cst_63 = arith.constant 1.000000e+00 : f32
    %113 = vector.broadcast %cst_63 : f32 to vector<8x128xf32>
    %114 = arith.addf %113, %112 : vector<8x128xf32>
    %115 = tpu.reciprocal %114 {approx = true} : vector<8x128xf32> -> vector<8x128xf32>
    %116 = arith.mulf %109, %115 : vector<8x128xf32>
    %c0_64 = arith.constant 0 : index
    %c0_65 = arith.constant 0 : index
    %c0_66 = arith.constant 0 : index
    %117 = vector.load %arg10[%c0_64, %c0_65, %c0_66] : memref<2x8x128xf32, #tpu.memory_space<vmem>>, vector<1x8x128xf32>
    %118 = vector.shape_cast %117 : vector<1x8x128xf32> to vector<8x128xf32>
    %119 = vector.shape_cast %116 : vector<8x128xf32> to vector<1x8x128xf32>
    tpu.vector_store %arg10[%c0_64, %c0_65, %c0_66], %119 {strides = array<i32>} : memref<2x8x128xf32, #tpu.memory_space<vmem>>, vector<1x8x128xf32>,
    %c0_67 = arith.constant 0 : index
    %c0_68 = arith.constant 0 : index
    %c0_69 = arith.constant 0 : index
    %120 = vector.load %arg11[%c0_67, %c0_68, %c0_69] : memref<4x8x128xf32, #tpu.memory_space<vmem>>, vector<1x8x128xf32>
    %121 = vector.shape_cast %120 : vector<1x8x128xf32> to vector<8x128xf32>
    %122 = arith.addf %116, %121 : vector<8x128xf32>
    %123 = arith.truncf %122 : vector<8x128xf32> to vector<8x128xbf16>
    %c5_70 = arith.constant 5 : index
    %c0_71 = arith.constant 0 : index
    %c0_72 = arith.constant 0 : index
    %124 = vector.load %arg4[%c5_70, %c0_71, %c0_72] : memref<10x128x128xbf16, #tpu.memory_space<vmem>>, vector<1x128x128xbf16>
    %125 = vector.shape_cast %124 : vector<1x128x128xbf16> to vector<128x128xbf16>
    %cst_73 = arith.constant dense<0.000000e+00> : vector<8x128xf32>
    %126 = tpu.matmul %123, %125, %cst_73 {dimension_numbers = #tpu.dot_dimension_numbers<[1], [0], [0], [1], [0, 0, 1, 1], [], []>} : vector<8x128xbf16>, vector<128x128xbf16>, vector<8x128xf32> -> vector<8x128xf32>
    %c7 = arith.constant 7 : index
    %c0_74 = arith.constant 0 : index
    %127 = vector.load %arg7[%c7, %c0_74] : memref<24x128xf32, #tpu.memory_space<vmem>>, vector<1x128xf32>
    %128 = vector.broadcast %127 : vector<1x128xf32> to vector<8x128xf32>
    %129 = arith.addf %126, %128 : vector<8x128xf32>
    %130 = tpu.iota {dimensions = array<i32: 1>} : vector<1x128xi32>
    %c32_i32 = arith.constant 32 : i32
    %131 = vector.broadcast %c32_i32 : i32 to vector<1x128xi32>
    %132 = arith.cmpi slt, %130, %131 : vector<1x128xi32>
    %cst_75 = arith.constant dense<0.000000e+00> : vector<8xf32>
    %133 = vector.multi_reduction <add>, %129, %cst_75 [1] : vector<8x128xf32> to vector<8xf32>
    %134 = vector.shape_cast %133 : vector<8xf32> to vector<8x1xf32>
    %cst_76 = arith.constant 3.125000e-02 : f32
    %135 = vector.broadcast %cst_76 : f32 to vector<8x1xf32>
    %136 = arith.mulf %134, %135 : vector<8x1xf32>
    %137 = vector.broadcast %136 : vector<8x1xf32> to vector<8x128xf32>
    %138 = arith.subf %129, %137 : vector<8x128xf32>
    %cst_77 = arith.constant 0.000000e+00 : f32
    %139 = vector.shape_cast %132 : vector<1x128xi1> to vector<1x128xi1>
    %140 = vector.broadcast %139 : vector<1x128xi1> to vector<8x128xi1>
    %141 = vector.broadcast %cst_77 : f32 to vector<8x128xf32>
    %142 = arith.select %140, %138, %141 : vector<8x128xi1>, vector<8x128xf32>
    %143 = arith.mulf %142, %142 : vector<8x128xf32>
    %cst_78 = arith.constant dense<0.000000e+00> : vector<8xf32>
    %144 = vector.multi_reduction <add>, %143, %cst_78 [1] : vector<8x128xf32> to vector<8xf32>
    %145 = vector.shape_cast %144 : vector<8xf32> to vector<8x1xf32>
    %cst_79 = arith.constant 3.125000e-02 : f32
    %146 = vector.broadcast %cst_79 : f32 to vector<8x1xf32>
    %147 = arith.mulf %145, %146 : vector<8x1xf32>
    %cst_80 = arith.constant 9.99999974E-6 : f32
    %148 = vector.broadcast %cst_80 : f32 to vector<8x1xf32>
    %149 = arith.addf %147, %148 : vector<8x1xf32>
    %150 = math.rsqrt %149 : vector<8x1xf32>
    %151 = vector.broadcast %150 : vector<8x1xf32> to vector<8x128xf32>
    %152 = arith.mulf %142, %151 : vector<8x128xf32>
    %c8 = arith.constant 8 : index
    %c0_81 = arith.constant 0 : index
    %153 = vector.load %arg7[%c8, %c0_81] : memref<24x128xf32, #tpu.memory_space<vmem>>, vector<1x128xf32>
    %154 = vector.broadcast %153 : vector<1x128xf32> to vector<8x128xf32>
    %155 = arith.mulf %152, %154 : vector<8x128xf32>
    %c9 = arith.constant 9 : index
    %c0_82 = arith.constant 0 : index
    %156 = vector.load %arg7[%c9, %c0_82] : memref<24x128xf32, #tpu.memory_space<vmem>>, vector<1x128xf32>
    %157 = vector.broadcast %156 : vector<1x128xf32> to vector<8x128xf32>
    %158 = arith.addf %155, %157 : vector<8x128xf32>
    %cst_83 = arith.constant 0.000000e+00 : f32
    %159 = vector.broadcast %cst_83 : f32 to vector<8x128xf32>
    %160 = arith.subf %159, %158 : vector<8x128xf32>
    %161 = math.exp %160 : vector<8x128xf32>
    %cst_84 = arith.constant 1.000000e+00 : f32
    %162 = vector.broadcast %cst_84 : f32 to vector<8x128xf32>
    %163 = arith.addf %162, %161 : vector<8x128xf32>
    %164 = tpu.reciprocal %163 {approx = true} : vector<8x128xf32> -> vector<8x128xf32>
    %165 = arith.mulf %158, %164 : vector<8x128xf32>
    %c1_85 = arith.constant 1 : index
    %c0_86 = arith.constant 0 : index
    %c0_87 = arith.constant 0 : index
    %166 = vector.load %arg10[%c1_85, %c0_86, %c0_87] : memref<2x8x128xf32, #tpu.memory_space<vmem>>, vector<1x8x128xf32>
    %167 = vector.shape_cast %166 : vector<1x8x128xf32> to vector<8x128xf32>
    %168 = vector.shape_cast %165 : vector<8x128xf32> to vector<1x8x128xf32>
    tpu.vector_store %arg10[%c1_85, %c0_86, %c0_87], %168 {strides = array<i32>} : memref<2x8x128xf32, #tpu.memory_space<vmem>>, vector<1x8x128xf32>,
    %c1_88 = arith.constant 1 : index
    %c0_89 = arith.constant 0 : index
    %c0_90 = arith.constant 0 : index
    %169 = vector.load %arg11[%c1_88, %c0_89, %c0_90] : memref<4x8x128xf32, #tpu.memory_space<vmem>>, vector<1x8x128xf32>
    %170 = vector.shape_cast %169 : vector<1x8x128xf32> to vector<8x128xf32>
    %171 = arith.addf %165, %170 : vector<8x128xf32>
    %172 = arith.truncf %171 : vector<8x128xf32> to vector<8x128xbf16>
    %c6_91 = arith.constant 6 : index
    %c0_92 = arith.constant 0 : index
    %c0_93 = arith.constant 0 : index
    %173 = vector.load %arg4[%c6_91, %c0_92, %c0_93] : memref<10x128x128xbf16, #tpu.memory_space<vmem>>, vector<1x128x128xbf16>
    %174 = vector.shape_cast %173 : vector<1x128x128xbf16> to vector<128x128xbf16>
    %cst_94 = arith.constant dense<0.000000e+00> : vector<8x128xf32>
    %175 = tpu.matmul %172, %174, %cst_94 {dimension_numbers = #tpu.dot_dimension_numbers<[1], [0], [0], [1], [0, 0, 1, 1], [], []>} : vector<8x128xbf16>, vector<128x128xbf16>, vector<8x128xf32> -> vector<8x128xf32>
    %c10 = arith.constant 10 : index
    %c0_95 = arith.constant 0 : index
    %176 = vector.load %arg7[%c10, %c0_95] : memref<24x128xf32, #tpu.memory_space<vmem>>, vector<1x128xf32>
    %177 = vector.broadcast %176 : vector<1x128xf32> to vector<8x128xf32>
    %178 = arith.addf %175, %177 : vector<8x128xf32>
    %179 = tpu.iota {dimensions = array<i32: 1>} : vector<1x128xi32>
    %c16_i32 = arith.constant 16 : i32
    %180 = vector.broadcast %c16_i32 : i32 to vector<1x128xi32>
    %181 = arith.cmpi slt, %179, %180 : vector<1x128xi32>
    %cst_96 = arith.constant dense<0.000000e+00> : vector<8xf32>
    %182 = vector.multi_reduction <add>, %178, %cst_96 [1] : vector<8x128xf32> to vector<8xf32>
    %183 = vector.shape_cast %182 : vector<8xf32> to vector<8x1xf32>
    %cst_97 = arith.constant 6.250000e-02 : f32
    %184 = vector.broadcast %cst_97 : f32 to vector<8x1xf32>
    %185 = arith.mulf %183, %184 : vector<8x1xf32>
    %186 = vector.broadcast %185 : vector<8x1xf32> to vector<8x128xf32>
    %187 = arith.subf %178, %186 : vector<8x128xf32>
    %cst_98 = arith.constant 0.000000e+00 : f32
    %188 = vector.shape_cast %181 : vector<1x128xi1> to vector<1x128xi1>
    %189 = vector.broadcast %188 : vector<1x128xi1> to vector<8x128xi1>
    %190 = vector.broadcast %cst_98 : f32 to vector<8x128xf32>
    %191 = arith.select %189, %187, %190 : vector<8x128xi1>, vector<8x128xf32>
    %192 = arith.mulf %191, %191 : vector<8x128xf32>
    %cst_99 = arith.constant dense<0.000000e+00> : vector<8xf32>
    %193 = vector.multi_reduction <add>, %192, %cst_99 [1] : vector<8x128xf32> to vector<8xf32>
    %194 = vector.shape_cast %193 : vector<8xf32> to vector<8x1xf32>
    %cst_100 = arith.constant 6.250000e-02 : f32
    %195 = vector.broadcast %cst_100 : f32 to vector<8x1xf32>
    %196 = arith.mulf %194, %195 : vector<8x1xf32>
    %cst_101 = arith.constant 9.99999974E-6 : f32
    %197 = vector.broadcast %cst_101 : f32 to vector<8x1xf32>
    %198 = arith.addf %196, %197 : vector<8x1xf32>
    %199 = math.rsqrt %198 : vector<8x1xf32>
    %200 = vector.broadcast %199 : vector<8x1xf32> to vector<8x128xf32>
    %201 = arith.mulf %191, %200 : vector<8x128xf32>
    %c11 = arith.constant 11 : index
    %c0_102 = arith.constant 0 : index
    %202 = vector.load %arg7[%c11, %c0_102] : memref<24x128xf32, #tpu.memory_space<vmem>>, vector<1x128xf32>
    %203 = vector.broadcast %202 : vector<1x128xf32> to vector<8x128xf32>
    %204 = arith.mulf %201, %203 : vector<8x128xf32>
    %c12 = arith.constant 12 : index
    %c0_103 = arith.constant 0 : index
    %205 = vector.load %arg7[%c12, %c0_103] : memref<24x128xf32, #tpu.memory_space<vmem>>, vector<1x128xf32>
    %206 = vector.broadcast %205 : vector<1x128xf32> to vector<8x128xf32>
    %207 = arith.addf %204, %206 : vector<8x128xf32>
    %cst_104 = arith.constant 0.000000e+00 : f32
    %208 = vector.broadcast %cst_104 : f32 to vector<8x128xf32>
    %209 = arith.subf %208, %207 : vector<8x128xf32>
    %210 = math.exp %209 : vector<8x128xf32>
    %cst_105 = arith.constant 1.000000e+00 : f32
    %211 = vector.broadcast %cst_105 : f32 to vector<8x128xf32>
    %212 = arith.addf %211, %210 : vector<8x128xf32>
    %213 = tpu.reciprocal %212 {approx = true} : vector<8x128xf32> -> vector<8x128xf32>
    %214 = arith.mulf %207, %213 : vector<8x128xf32>
    %c2_106 = arith.constant 2 : index
    %c0_107 = arith.constant 0 : index
    %c0_108 = arith.constant 0 : index
    %215 = vector.load %arg11[%c2_106, %c0_107, %c0_108] : memref<4x8x128xf32, #tpu.memory_space<vmem>>, vector<1x8x128xf32>
    %216 = vector.shape_cast %215 : vector<1x8x128xf32> to vector<8x128xf32>
    %217 = arith.addf %214, %216 : vector<8x128xf32>
    %218 = arith.truncf %217 : vector<8x128xf32> to vector<8x128xbf16>
    %c7_109 = arith.constant 7 : index
    %c0_110 = arith.constant 0 : index
    %c0_111 = arith.constant 0 : index
    %219 = vector.load %arg4[%c7_109, %c0_110, %c0_111] : memref<10x128x128xbf16, #tpu.memory_space<vmem>>, vector<1x128x128xbf16>
    %220 = vector.shape_cast %219 : vector<1x128x128xbf16> to vector<128x128xbf16>
    %cst_112 = arith.constant dense<0.000000e+00> : vector<8x128xf32>
    %221 = tpu.matmul %218, %220, %cst_112 {dimension_numbers = #tpu.dot_dimension_numbers<[1], [0], [0], [1], [0, 0, 1, 1], [], []>} : vector<8x128xbf16>, vector<128x128xbf16>, vector<8x128xf32> -> vector<8x128xf32>
    %c13 = arith.constant 13 : index
    %c0_113 = arith.constant 0 : index
    %222 = vector.load %arg7[%c13, %c0_113] : memref<24x128xf32, #tpu.memory_space<vmem>>, vector<1x128xf32>
    %223 = vector.broadcast %222 : vector<1x128xf32> to vector<8x128xf32>
    %224 = arith.addf %221, %223 : vector<8x128xf32>
    %225 = tpu.iota {dimensions = array<i32: 1>} : vector<1x128xi32>
    %c32_i32_114 = arith.constant 32 : i32
    %226 = vector.broadcast %c32_i32_114 : i32 to vector<1x128xi32>
    %227 = arith.cmpi slt, %225, %226 : vector<1x128xi32>
    %cst_115 = arith.constant dense<0.000000e+00> : vector<8xf32>
    %228 = vector.multi_reduction <add>, %224, %cst_115 [1] : vector<8x128xf32> to vector<8xf32>
    %229 = vector.shape_cast %228 : vector<8xf32> to vector<8x1xf32>
    %cst_116 = arith.constant 3.125000e-02 : f32
    %230 = vector.broadcast %cst_116 : f32 to vector<8x1xf32>
    %231 = arith.mulf %229, %230 : vector<8x1xf32>
    %232 = vector.broadcast %231 : vector<8x1xf32> to vector<8x128xf32>
    %233 = arith.subf %224, %232 : vector<8x128xf32>
    %cst_117 = arith.constant 0.000000e+00 : f32
    %234 = vector.shape_cast %227 : vector<1x128xi1> to vector<1x128xi1>
    %235 = vector.broadcast %234 : vector<1x128xi1> to vector<8x128xi1>
    %236 = vector.broadcast %cst_117 : f32 to vector<8x128xf32>
    %237 = arith.select %235, %233, %236 : vector<8x128xi1>, vector<8x128xf32>
    %238 = arith.mulf %237, %237 : vector<8x128xf32>
    %cst_118 = arith.constant dense<0.000000e+00> : vector<8xf32>
    %239 = vector.multi_reduction <add>, %238, %cst_118 [1] : vector<8x128xf32> to vector<8xf32>
    %240 = vector.shape_cast %239 : vector<8xf32> to vector<8x1xf32>
    %cst_119 = arith.constant 3.125000e-02 : f32
    %241 = vector.broadcast %cst_119 : f32 to vector<8x1xf32>
    %242 = arith.mulf %240, %241 : vector<8x1xf32>
    %cst_120 = arith.constant 9.99999974E-6 : f32
    %243 = vector.broadcast %cst_120 : f32 to vector<8x1xf32>
    %244 = arith.addf %242, %243 : vector<8x1xf32>
    %245 = math.rsqrt %244 : vector<8x1xf32>
    %246 = vector.broadcast %245 : vector<8x1xf32> to vector<8x128xf32>
    %247 = arith.mulf %237, %246 : vector<8x128xf32>
    %c14 = arith.constant 14 : index
    %c0_121 = arith.constant 0 : index
    %248 = vector.load %arg7[%c14, %c0_121] : memref<24x128xf32, #tpu.memory_space<vmem>>, vector<1x128xf32>
    %249 = vector.broadcast %248 : vector<1x128xf32> to vector<8x128xf32>
    %250 = arith.mulf %247, %249 : vector<8x128xf32>
    %c15 = arith.constant 15 : index
    %c0_122 = arith.constant 0 : index
    %251 = vector.load %arg7[%c15, %c0_122] : memref<24x128xf32, #tpu.memory_space<vmem>>, vector<1x128xf32>
    %252 = vector.broadcast %251 : vector<1x128xf32> to vector<8x128xf32>
    %253 = arith.addf %250, %252 : vector<8x128xf32>
    %cst_123 = arith.constant 0.000000e+00 : f32
    %254 = vector.broadcast %cst_123 : f32 to vector<8x128xf32>
    %255 = arith.subf %254, %253 : vector<8x128xf32>
    %256 = math.exp %255 : vector<8x128xf32>
    %cst_124 = arith.constant 1.000000e+00 : f32
    %257 = vector.broadcast %cst_124 : f32 to vector<8x128xf32>
    %258 = arith.addf %257, %256 : vector<8x128xf32>
    %259 = tpu.reciprocal %258 {approx = true} : vector<8x128xf32> -> vector<8x128xf32>
    %260 = arith.mulf %253, %259 : vector<8x128xf32>
    %c1_125 = arith.constant 1 : index
    %c0_126 = arith.constant 0 : index
    %c0_127 = arith.constant 0 : index
    %261 = vector.load %arg10[%c1_125, %c0_126, %c0_127] : memref<2x8x128xf32, #tpu.memory_space<vmem>>, vector<1x8x128xf32>
    %262 = vector.shape_cast %261 : vector<1x8x128xf32> to vector<8x128xf32>
    %263 = arith.addf %260, %262 : vector<8x128xf32>
    %c3_128 = arith.constant 3 : index
    %c0_129 = arith.constant 0 : index
    %c0_130 = arith.constant 0 : index
    %264 = vector.load %arg11[%c3_128, %c0_129, %c0_130] : memref<4x8x128xf32, #tpu.memory_space<vmem>>, vector<1x8x128xf32>
    %265 = vector.shape_cast %264 : vector<1x8x128xf32> to vector<8x128xf32>
    %266 = arith.addf %263, %265 : vector<8x128xf32>
    %267 = arith.truncf %266 : vector<8x128xf32> to vector<8x128xbf16>
    %c8_131 = arith.constant 8 : index
    %c0_132 = arith.constant 0 : index
    %c0_133 = arith.constant 0 : index
    %268 = vector.load %arg4[%c8_131, %c0_132, %c0_133] : memref<10x128x128xbf16, #tpu.memory_space<vmem>>, vector<1x128x128xbf16>
    %269 = vector.shape_cast %268 : vector<1x128x128xbf16> to vector<128x128xbf16>
    %cst_134 = arith.constant dense<0.000000e+00> : vector<8x128xf32>
    %270 = tpu.matmul %267, %269, %cst_134 {dimension_numbers = #tpu.dot_dimension_numbers<[1], [0], [0], [1], [0, 0, 1, 1], [], []>} : vector<8x128xbf16>, vector<128x128xbf16>, vector<8x128xf32> -> vector<8x128xf32>
    %c16 = arith.constant 16 : index
    %c0_135 = arith.constant 0 : index
    %271 = vector.load %arg7[%c16, %c0_135] : memref<24x128xf32, #tpu.memory_space<vmem>>, vector<1x128xf32>
    %272 = vector.broadcast %271 : vector<1x128xf32> to vector<8x128xf32>
    %273 = arith.addf %270, %272 : vector<8x128xf32>
    %274 = tpu.iota {dimensions = array<i32: 1>} : vector<1x128xi32>
    %c64_i32_136 = arith.constant 64 : i32
    %275 = vector.broadcast %c64_i32_136 : i32 to vector<1x128xi32>
    %276 = arith.cmpi slt, %274, %275 : vector<1x128xi32>
    %cst_137 = arith.constant dense<0.000000e+00> : vector<8xf32>
    %277 = vector.multi_reduction <add>, %273, %cst_137 [1] : vector<8x128xf32> to vector<8xf32>
    %278 = vector.shape_cast %277 : vector<8xf32> to vector<8x1xf32>
    %cst_138 = arith.constant 1.562500e-02 : f32
    %279 = vector.broadcast %cst_138 : f32 to vector<8x1xf32>
    %280 = arith.mulf %278, %279 : vector<8x1xf32>
    %281 = vector.broadcast %280 : vector<8x1xf32> to vector<8x128xf32>
    %282 = arith.subf %273, %281 : vector<8x128xf32>
    %cst_139 = arith.constant 0.000000e+00 : f32
    %283 = vector.shape_cast %276 : vector<1x128xi1> to vector<1x128xi1>
    %284 = vector.broadcast %283 : vector<1x128xi1> to vector<8x128xi1>
    %285 = vector.broadcast %cst_139 : f32 to vector<8x128xf32>
    %286 = arith.select %284, %282, %285 : vector<8x128xi1>, vector<8x128xf32>
    %287 = arith.mulf %286, %286 : vector<8x128xf32>
    %cst_140 = arith.constant dense<0.000000e+00> : vector<8xf32>
    %288 = vector.multi_reduction <add>, %287, %cst_140 [1] : vector<8x128xf32> to vector<8xf32>
    %289 = vector.shape_cast %288 : vector<8xf32> to vector<8x1xf32>
    %cst_141 = arith.constant 1.562500e-02 : f32
    %290 = vector.broadcast %cst_141 : f32 to vector<8x1xf32>
    %291 = arith.mulf %289, %290 : vector<8x1xf32>
    %cst_142 = arith.constant 9.99999974E-6 : f32
    %292 = vector.broadcast %cst_142 : f32 to vector<8x1xf32>
    %293 = arith.addf %291, %292 : vector<8x1xf32>
    %294 = math.rsqrt %293 : vector<8x1xf32>
    %295 = vector.broadcast %294 : vector<8x1xf32> to vector<8x128xf32>
    %296 = arith.mulf %286, %295 : vector<8x128xf32>
    %c17 = arith.constant 17 : index
    %c0_143 = arith.constant 0 : index
    %297 = vector.load %arg7[%c17, %c0_143] : memref<24x128xf32, #tpu.memory_space<vmem>>, vector<1x128xf32>
    %298 = vector.broadcast %297 : vector<1x128xf32> to vector<8x128xf32>
    %299 = arith.mulf %296, %298 : vector<8x128xf32>
    %c18 = arith.constant 18 : index
    %c0_144 = arith.constant 0 : index
    %300 = vector.load %arg7[%c18, %c0_144] : memref<24x128xf32, #tpu.memory_space<vmem>>, vector<1x128xf32>
    %301 = vector.broadcast %300 : vector<1x128xf32> to vector<8x128xf32>
    %302 = arith.addf %299, %301 : vector<8x128xf32>
    %cst_145 = arith.constant 0.000000e+00 : f32
    %303 = vector.broadcast %cst_145 : f32 to vector<8x128xf32>
    %304 = arith.subf %303, %302 : vector<8x128xf32>
    %305 = math.exp %304 : vector<8x128xf32>
    %cst_146 = arith.constant 1.000000e+00 : f32
    %306 = vector.broadcast %cst_146 : f32 to vector<8x128xf32>
    %307 = arith.addf %306, %305 : vector<8x128xf32>
    %308 = tpu.reciprocal %307 {approx = true} : vector<8x128xf32> -> vector<8x128xf32>
    %309 = arith.mulf %302, %308 : vector<8x128xf32>
    %c0_147 = arith.constant 0 : index
    %c0_148 = arith.constant 0 : index
    %c0_149 = arith.constant 0 : index
    %310 = vector.load %arg10[%c0_147, %c0_148, %c0_149] : memref<2x8x128xf32, #tpu.memory_space<vmem>>, vector<1x8x128xf32>
    %311 = vector.shape_cast %310 : vector<1x8x128xf32> to vector<8x128xf32>
    %312 = arith.addf %309, %311 : vector<8x128xf32>
    %313 = arith.truncf %312 : vector<8x128xf32> to vector<8x128xbf16>
    %c9_150 = arith.constant 9 : index
    %c0_151 = arith.constant 0 : index
    %c0_152 = arith.constant 0 : index
    %314 = vector.load %arg4[%c9_150, %c0_151, %c0_152] : memref<10x128x128xbf16, #tpu.memory_space<vmem>>, vector<1x128x128xbf16>
    %315 = vector.shape_cast %314 : vector<1x128x128xbf16> to vector<128x128xbf16>
    %cst_153 = arith.constant dense<0.000000e+00> : vector<8x128xf32>
    %316 = tpu.matmul %313, %315, %cst_153 {dimension_numbers = #tpu.dot_dimension_numbers<[1], [0], [0], [1], [0, 0, 1, 1], [], []>} : vector<8x128xbf16>, vector<128x128xbf16>, vector<8x128xf32> -> vector<8x128xf32>
    %c19 = arith.constant 19 : index
    %c0_154 = arith.constant 0 : index
    %317 = vector.load %arg7[%c19, %c0_154] : memref<24x128xf32, #tpu.memory_space<vmem>>, vector<1x128xf32>
    %318 = vector.broadcast %317 : vector<1x128xf32> to vector<8x128xf32>
    %319 = arith.addf %316, %318 : vector<8x128xf32>
    %c0_155 = arith.constant 0 : index
    %c0_156 = arith.constant 0 : index
    %320 = vector.load %arg9[%c0_155, %c0_156] : memref<8x128xf32, #tpu.memory_space<vmem>>, vector<8x128xf32>
    tpu.vector_store %arg9[%c0_155, %c0_156], %319 {strides = array<i32>} : memref<8x128xf32, #tpu.memory_space<vmem>>, vector<8x128xf32>,
    return
  }
  func.func @transform_0(%arg0: i32) -> (i32, i32) {
    %c0_i32 = arith.constant 0 : i32
    %c0_i32_0 = arith.constant 0 : i32
    return %arg0, %c0_i32 : i32, i32
  }
  func.func @transform_1(%arg0: i32) -> (i32, i32) {
    %c0_i32 = arith.constant 0 : i32
    %c0_i32_0 = arith.constant 0 : i32
    return %arg0, %c0_i32 : i32, i32
  }
  func.func @transform_2(%arg0: i32) -> (i32, i32) {
    %c0_i32 = arith.constant 0 : i32
    %c0_i32_0 = arith.constant 0 : i32
    return %arg0, %c0_i32 : i32, i32
  }
  func.func @transform_3(%arg0: i32) -> (i32, i32, i32) {
    %c0_i32 = arith.constant 0 : i32
    %c0_i32_0 = arith.constant 0 : i32
    %c0_i32_1 = arith.constant 0 : i32
    %c0_i32_2 = arith.constant 0 : i32
    return %c0_i32, %c0_i32_0, %c0_i32_1 : i32, i32, i32
  }
  func.func @transform_4(%arg0: i32) -> (i32, i32) {
    %c0_i32 = arith.constant 0 : i32
    %c0_i32_0 = arith.constant 0 : i32
    %c0_i32_1 = arith.constant 0 : i32
    return %c0_i32, %c0_i32_0 : i32, i32
  }
  func.func @transform_5(%arg0: i32) -> (i32, i32) {
    %c0_i32 = arith.constant 0 : i32
    %c0_i32_0 = arith.constant 0 : i32
    %c0_i32_1 = arith.constant 0 : i32
    return %c0_i32, %c0_i32_0 : i32, i32
  }
  func.func @transform_6(%arg0: i32) -> (i32, i32) {
    %c0_i32 = arith.constant 0 : i32
    %c0_i32_0 = arith.constant 0 : i32
    %c0_i32_1 = arith.constant 0 : i32
    return %c0_i32, %c0_i32_0 : i32, i32
  }
  func.func @transform_7(%arg0: i32) -> (i32, i32) {
    %c0_i32 = arith.constant 0 : i32
    %c0_i32_0 = arith.constant 0 : i32
    %c0_i32_1 = arith.constant 0 : i32
    return %c0_i32, %c0_i32_0 : i32, i32
  }
  func.func @transform_8(%arg0: i32) -> (i32, i32) {
    %c0_i32 = arith.constant 0 : i32
    %c0_i32_0 = arith.constant 0 : i32
    return %arg0, %c0_i32 : i32, i32
  }
}

</mosaic_0001>

<llo_original>
// kernel: diffusion_prior_unet_forward.1
$region0: #{diffusion_prior_unet_forward.1}
  #allocation0 [shape = 'u32[]', space=smem, size = 0x4, offset = 0x4, fixed_abs, tag = 'smem constant byte address 0x4 - core index']
  #allocation1 [shape = 'u32[144,128]{1,0:T(1,128)}', space=vmem, size = 0x12000, scoped, tag = 'internal scratch']
  #allocation2 [shape = 'f32[2,8,128]{2,1,0:T(8,128)}', space=vmem, size = 0x2000, scoped, tag = 'scratch operand']
  #allocation3 [shape = 'f32[4,8,128]{2,1,0:T(8,128)}', space=vmem, size = 0x4000, scoped, tag = 'scratch operand']
  %s0 = inlined_call_operand.vmem [shape: f32[8,128], index: 0, kind: input, shape index: {}]
  %s1 = inlined_call_operand.vmem [shape: f32[8,128], index: 1, kind: input, shape index: {}]
  %s2 = inlined_call_operand.vmem [shape: f32[8,128], index: 2, kind: input, shape index: {}]
  %s3 = inlined_call_operand.vmem [shape: bf16[10,128,128], index: 3, kind: input, shape index: {}]
  %s4 = inlined_call_operand.vmem [shape: bf16[128,512], index: 4, kind: input, shape index: {}]
  %s5 = inlined_call_operand.vmem [shape: bf16[128,512], index: 5, kind: input, shape index: {}]
  %s6 = inlined_call_operand.vmem [shape: f32[24,128], index: 6, kind: input, shape index: {}]
  %s7 = inlined_call_operand.vmem [shape: f32[8,512], index: 7, kind: input, shape index: {}]
  %s8 = inlined_call_operand.vmem [shape: f32[8,128], index: 8, kind: output, shape index: {}]
  %s9 = sld [smem:[#allocation0]]
  $region42: #{diffusion_prior_unet_forward.1} parent=0
    _
  %s11 = ssub.s32 1, %s9
  %s12 = scalar_select 0, %s11, %s9
  // Predicated region
  $region2: #{diffusion_prior_unet_forward.1} parent=0 // pred_check
    _
  $region3: #{diffusion_prior_unet_forward.1} parent=0 // pred_check_branch
    %14 = sbr.rel (0) target = $region5
  $region4: #{diffusion_prior_unet_forward.1} parent=0 // pred_region
    _
  $region5: #{diffusion_prior_unet_forward.1} parent=0 // pred_fallthru
    _
  // Predicated region
  $region6: #{diffusion_prior_unet_forward.1} parent=0 // pred_check
    _
  $region7: #{diffusion_prior_unet_forward.1} parent=0 // pred_check_branch
    %16 = sbr.rel (0) target = $region9
  $region8: #{diffusion_prior_unet_forward.1} parent=0 // pred_region
    _
  $region9: #{diffusion_prior_unet_forward.1} parent=0 // pred_fallthru
    _
  // Predicated region
  $region10: #{diffusion_prior_unet_forward.1} parent=0 // pred_check
    _
  $region11: #{diffusion_prior_unet_forward.1} parent=0 // pred_check_branch
    %18 = sbr.rel (0) target = $region13
  $region12: #{diffusion_prior_unet_forward.1} parent=0 // pred_region
    _
  $region13: #{diffusion_prior_unet_forward.1} parent=0 // pred_fallthru
    _
  // Predicated region
  $region14: #{diffusion_prior_unet_forward.1} parent=0 // pred_check
    _
  $region15: #{diffusion_prior_unet_forward.1} parent=0 // pred_check_branch
    %20 = sbr.rel (0) target = $region17
  $region16: #{diffusion_prior_unet_forward.1} parent=0 // pred_region
    _
  $region17: #{diffusion_prior_unet_forward.1} parent=0 // pred_fallthru
    _
  // Predicated region
  $region18: #{diffusion_prior_unet_forward.1} parent=0 // pred_check
    _
  $region19: #{diffusion_prior_unet_forward.1} parent=0 // pred_check_branch
    %22 = sbr.rel (0) target = $region21
  $region20: #{diffusion_prior_unet_forward.1} parent=0 // pred_region
    _
  $region21: #{diffusion_prior_unet_forward.1} parent=0 // pred_fallthru
    _
  // Predicated region
  $region22: #{diffusion_prior_unet_forward.1} parent=0 // pred_check
    _
  $region23: #{diffusion_prior_unet_forward.1} parent=0 // pred_check_branch
    %24 = sbr.rel (0) target = $region25
  $region24: #{diffusion_prior_unet_forward.1} parent=0 // pred_region
    _
  $region25: #{diffusion_prior_unet_forward.1} parent=0 // pred_fallthru
    _
  // Predicated region
  $region26: #{diffusion_prior_unet_forward.1} parent=0 // pred_check
    _
  $region27: #{diffusion_prior_unet_forward.1} parent=0 // pred_check_branch
    %26 = sbr.rel (0) target = $region29
  $region28: #{diffusion_prior_unet_forward.1} parent=0 // pred_region
    _
  $region29: #{diffusion_prior_unet_forward.1} parent=0 // pred_fallthru
    _
  // Predicated region
  $region30: #{diffusion_prior_unet_forward.1} parent=0 // pred_check
    _
  $region31: #{diffusion_prior_unet_forward.1} parent=0 // pred_check_branch
    %28 = sbr.rel (0) target = $region33
  $region32: #{diffusion_prior_unet_forward.1} parent=0 // pred_region
    _
  $region33: #{diffusion_prior_unet_forward.1} parent=0 // pred_fallthru
    _
  %v30 = vld [vmem:[%s1] sm:$0xff]
  %v31 = vpack.c.bf16 %v30, %v30
  %v32 = vld [vmem:[%s4] sm:$0xff]
  %v33 = vld [vmem:[%s4 + $0x8] sm:$0xff]
  %v34 = vld [vmem:[%s4 + $0x10] sm:$0xff]
  %v35 = vld [vmem:[%s4 + $0x18] sm:$0xff]
  %v36 = vld [vmem:[%s4 + $0x20] sm:$0xff]
  %v37 = vld [vmem:[%s4 + $0x28] sm:$0xff]
  %v38 = vld [vmem:[%s4 + $0x30] sm:$0xff]
  %v39 = vld [vmem:[%s4 + $0x38] sm:$0xff]
  %v40 = vld [vmem:[%s4 + $0x40] sm:$0xff]
  %v41 = vld [vmem:[%s4 + $0x48] sm:$0xff]
  %v42 = vld [vmem:[%s4 + $0x50] sm:$0xff]
  %v43 = vld [vmem:[%s4 + $0x58] sm:$0xff]
  %v44 = vld [vmem:[%s4 + $0x60] sm:$0xff]
  %v45 = vld [vmem:[%s4 + $0x68] sm:$0xff]
  %v46 = vld [vmem:[%s4 + $0x70] sm:$0xff]
  %v47 = vld [vmem:[%s4 + $0x78] sm:$0xff]
  %v48 = vld [vmem:[%s4 + $0x80] sm:$0xff]
  %v49 = vld [vmem:[%s4 + $0x88] sm:$0xff]
  %v50 = vld [vmem:[%s4 + $0x90] sm:$0xff]
  %v51 = vld [vmem:[%s4 + $0x98] sm:$0xff]
  %v52 = vld [vmem:[%s4 + $0xa0] sm:$0xff]
  %v53 = vld [vmem:[%s4 + $0xa8] sm:$0xff]
  %v54 = vld [vmem:[%s4 + $0xb0] sm:$0xff]
  %v55 = vld [vmem:[%s4 + $0xb8] sm:$0xff]
  %v56 = vld [vmem:[%s4 + $0xc0] sm:$0xff]
  %v57 = vld [vmem:[%s4 + $0xc8] sm:$0xff]
  %v58 = vld [vmem:[%s4 + $0xd0] sm:$0xff]
  %v59 = vld [vmem:[%s4 + $0xd8] sm:$0xff]
  %v60 = vld [vmem:[%s4 + $0xe0] sm:$0xff]
  %v61 = vld [vmem:[%s4 + $0xe8] sm:$0xff]
  %v62 = vld [vmem:[%s4 + $0xf0] sm:$0xff]
  %v63 = vld [vmem:[%s4 + $0xf8] sm:$0xff]
  %v64 = vld [vmem:[%s7] ss:$8 sm:$0xf]
  %v66 = vlaneseq
  %v67 = vshrl.u32 %v66, 7
  %v68 = vsub.s32 0, %v67
  %v69 = vrot.slane %v64, %v68
  %v70 = vlaneseq
  %v71 = vshrl.u32 %v70, 7
  %v72 = vsub.s32 1, %v71
  %v73 = vrot.slane %v64, %v72
  %v74 = vlaneseq
  %v75 = vshrl.u32 %v74, 7
  %v76 = vsub.s32 2, %v75
  %v77 = vrot.slane %v64, %v76
  %v78 = vlaneseq
  %v79 = vshrl.u32 %v78, 7
  %v80 = vsub.s32 3, %v79
  %v81 = vrot.slane %v64, %v80
  %v118 = vunpack.c.l.b16 %v32
  %v119 = vunpack.c.h.b16 %v32
  %v120 = vunpack.c.l.b16 %v33
  %v121 = vunpack.c.h.b16 %v33
  %v122 = vunpack.c.l.b16 %v34
  %v123 = vunpack.c.h.b16 %v34
  %v124 = vunpack.c.l.b16 %v35
  %v125 = vunpack.c.h.b16 %v35
  %v126 = vunpack.c.l.b16 %v36
  %v127 = vunpack.c.h.b16 %v36
  %v128 = vunpack.c.l.b16 %v37
  %v129 = vunpack.c.h.b16 %v37
  %v130 = vunpack.c.l.b16 %v38
  %v131 = vunpack.c.h.b16 %v38
  %v132 = vunpack.c.l.b16 %v39
  %v133 = vunpack.c.h.b16 %v39
  %v134 = vunpack.c.l.b16 %v40
  %v135 = vunpack.c.h.b16 %v40
  %v136 = vunpack.c.l.b16 %v41
  %v137 = vunpack.c.h.b16 %v41
  %v138 = vunpack.c.l.b16 %v42
  %v139 = vunpack.c.h.b16 %v42
  %v140 = vunpack.c.l.b16 %v43
  %v141 = vunpack.c.h.b16 %v43
  %v142 = vunpack.c.l.b16 %v44
  %v143 = vunpack.c.h.b16 %v44
  %v144 = vunpack.c.l.b16 %v45
  %v145 = vunpack.c.h.b16 %v45
  %v146 = vunpack.c.l.b16 %v46
  %v147 = vunpack.c.h.b16 %v46
  %v148 = vunpack.c.l.b16 %v47
  %v149 = vunpack.c.h.b16 %v47
  %v150 = vunpack.c.l.b16 %v48
  %v151 = vunpack.c.h.b16 %v48
  %v152 = vunpack.c.l.b16 %v49
  %v153 = vunpack.c.h.b16 %v49
  %v154 = vunpack.c.l.b16 %v50
  %v155 = vunpack.c.h.b16 %v50
  %v156 = vunpack.c.l.b16 %v51
  %v157 = vunpack.c.h.b16 %v51
  %v158 = vunpack.c.l.b16 %v52
  %v159 = vunpack.c.h.b16 %v52
  %v160 = vunpack.c.l.b16 %v53
  %v161 = vunpack.c.h.b16 %v53
  %v162 = vunpack.c.l.b16 %v54
  %v163 = vunpack.c.h.b16 %v54
  %v164 = vunpack.c.l.b16 %v55
  %v165 = vunpack.c.h.b16 %v55
  %v166 = vunpack.c.l.b16 %v56
  %v167 = vunpack.c.h.b16 %v56
  %v168 = vunpack.c.l.b16 %v57
  %v169 = vunpack.c.h.b16 %v57
  %v170 = vunpack.c.l.b16 %v58
  %v171 = vunpack.c.h.b16 %v58
  %v172 = vunpack.c.l.b16 %v59
  %v173 = vunpack.c.h.b16 %v59
  %v174 = vunpack.c.l.b16 %v60
  %v175 = vunpack.c.h.b16 %v60
  %v176 = vunpack.c.l.b16 %v61
  %v177 = vunpack.c.h.b16 %v61
  %v178 = vunpack.c.l.b16 %v62
  %v179 = vunpack.c.h.b16 %v62
  %v180 = vunpack.c.l.b16 %v63
  %v181 = vunpack.c.h.b16 %v63
  %v182 = vpack.c.b16 %v122, %v118
  %v183 = vpack.c.b16 %v123, %v119
  %v184 = vpack.c.b16 %v124, %v120
  %v185 = vpack.c.b16 %v125, %v121
  %v186 = vpack.c.b16 %v130, %v126
  %v187 = vpack.c.b16 %v131, %v127
  %v188 = vpack.c.b16 %v132, %v128
  %v189 = vpack.c.b16 %v133, %v129
  %v190 = vpack.c.b16 %v138, %v134
  %v191 = vpack.c.b16 %v139, %v135
  %v192 = vpack.c.b16 %v140, %v136
  %v193 = vpack.c.b16 %v141, %v137
  %v194 = vpack.c.b16 %v146, %v142
  %v195 = vpack.c.b16 %v147, %v143
  %v196 = vpack.c.b16 %v148, %v144
  %v197 = vpack.c.b16 %v149, %v145
  %v198 = vpack.c.b16 %v154, %v150
  %v199 = vpack.c.b16 %v155, %v151
  %v200 = vpack.c.b16 %v156, %v152
  %v201 = vpack.c.b16 %v157, %v153
  %v202 = vpack.c.b16 %v162, %v158
  %v203 = vpack.c.b16 %v163, %v159
  %v204 = vpack.c.b16 %v164, %v160
  %v205 = vpack.c.b16 %v165, %v161
  %v206 = vpack.c.b16 %v170, %v166
  %v207 = vpack.c.b16 %v171, %v167
  %v208 = vpack.c.b16 %v172, %v168
  %v209 = vpack.c.b16 %v173, %v169
  %v210 = vpack.c.b16 %v178, %v174
  %v211 = vpack.c.b16 %v179, %v175
  %v212 = vpack.c.b16 %v180, %v176
  %v213 = vpack.c.b16 %v181, %v177
  %246 = vmatprep.subr.bf16.mxu0 %v183
  %247 = vmatpush1.bf16.msra.mxu0 %v182
  %248 = vmatprep.subr.bf16.mxu0 %v187
  %249 = vmatpush1.bf16.msra.mxu0 %v186
  %250 = vmatprep.subr.bf16.mxu0 %v191
  %251 = vmatpush1.bf16.msra.mxu0 %v190
  %252 = vmatprep.subr.bf16.mxu0 %v195
  %253 = vmatpush1.bf16.msra.mxu0 %v194
  %254 = vmatprep.subr.bf16.mxu0 %v199
  %255 = vmatpush1.bf16.msra.mxu0 %v198
  %256 = vmatprep.subr.bf16.mxu0 %v203
  %257 = vmatpush1.bf16.msra.mxu0 %v202
  %258 = vmatprep.subr.bf16.mxu0 %v207
  %259 = vmatpush1.bf16.msra.mxu0 %v206
  %260 = vmatprep.subr.bf16.mxu0 %v211
  %261 = vmatpush1.bf16.msra.mxu0 %v210
  %262 = vmatprep.subr.bf16.mxu0 0
  %263 = vmatpush1.bf16.msra.mxu0 0
  %264 = vmatprep.subr.bf16.mxu0 0
  %265 = vmatpush1.bf16.msra.mxu0 0
  %266 = vmatprep.subr.bf16.mxu0 0
  %267 = vmatpush1.bf16.msra.mxu0 0
  %268 = vmatprep.subr.bf16.mxu0 0
  %269 = vmatpush1.bf16.msra.mxu0 0
  %270 = vmatprep.subr.bf16.mxu0 0
  %271 = vmatpush1.bf16.msra.mxu0 0
  %272 = vmatprep.subr.bf16.mxu0 0
  %273 = vmatpush1.bf16.msra.mxu0 0
  %274 = vmatprep.subr.bf16.mxu0 0
  %275 = vmatpush1.bf16.msra.mxu0 0
  %276 = vmatprep.subr.bf16.mxu0 0
  %277 = vmatpush1.bf16.msra.mxu0 0
  %278 = vmatprep.mubr.bf16.mxu0 0
  %279 = vmatmul.mubr.bf16.gmra.mrb[0].mxu0 %v31
  %v280 = vpop.f32.mrb[0].mxu0
  %v281 = vadd.f32 %v69, %v280
  %v282 = vpop.f32.mrb[0].mxu0
  %v283 = vadd.f32 %v73, %v282
  %v284 = vpop.f32.mrb[0].mxu0
  %v285 = vpop.f32.mrb[0].mxu0
  %286 = vdwg.mxu0
  %287 = vmatprep.subr.bf16.mxu0 %v185
  %288 = vmatpush1.bf16.msra.mxu0 %v184
  %289 = vmatprep.subr.bf16.mxu0 %v189
  %290 = vmatpush1.bf16.msra.mxu0 %v188
  %291 = vmatprep.subr.bf16.mxu0 %v193
  %292 = vmatpush1.bf16.msra.mxu0 %v192
  %293 = vmatprep.subr.bf16.mxu0 %v197
  %294 = vmatpush1.bf16.msra.mxu0 %v196
  %295 = vmatprep.subr.bf16.mxu0 %v201
  %296 = vmatpush1.bf16.msra.mxu0 %v200
  %297 = vmatprep.subr.bf16.mxu0 %v205
  %298 = vmatpush1.bf16.msra.mxu0 %v204
  %299 = vmatprep.subr.bf16.mxu0 %v209
  %300 = vmatpush1.bf16.msra.mxu0 %v208
  %301 = vmatprep.subr.bf16.mxu0 %v213
  %302 = vmatpush1.bf16.msra.mxu0 %v212
  %303 = vmatprep.subr.bf16.mxu0 0
  %304 = vmatpush1.bf16.msra.mxu0 0
  %305 = vmatprep.subr.bf16.mxu0 0
  %306 = vmatpush1.bf16.msra.mxu0 0
  %307 = vmatprep.subr.bf16.mxu0 0
  %308 = vmatpush1.bf16.msra.mxu0 0
  %309 = vmatprep.subr.bf16.mxu0 0
  %310 = vmatpush1.bf16.msra.mxu0 0
  %311 = vmatprep.subr.bf16.mxu0 0
  %312 = vmatpush1.bf16.msra.mxu0 0
  %313 = vmatprep.subr.bf16.mxu0 0
  %314 = vmatpush1.bf16.msra.mxu0 0
  %315 = vmatprep.subr.bf16.mxu0 0
  %316 = vmatpush1.bf16.msra.mxu0 0
  %317 = vmatprep.subr.bf16.mxu0 0
  %318 = vmatpush1.bf16.msra.mxu0 0
  %319 = vmatprep.mubr.bf16.mxu0 0
  %320 = vmatmul.mubr.bf16.gmra.mrb[0].mxu0 %v31
  %v321 = vpop.f32.mrb[0].mxu0
  %v322 = vadd.f32 %v77, %v321
  %v323 = vpop.f32.mrb[0].mxu0
  %v324 = vadd.f32 %v81, %v323
  %v325 = vpop.f32.mrb[0].mxu0
  %v326 = vpop.f32.mrb[0].mxu0
  %327 = vdwg.mxu0
  %v328 = vsub.f32 0.0, %v281
  %v329 = vsub.f32 0.0, %v283
  %v330 = vsub.f32 0.0, %v322
  %v331 = vsub.f32 0.0, %v324
  %v332 = vmul.f32 %v328, 1.442695
  %v333 = vpow.pop %v332
  %v334 = vmul.f32 %v329, 1.442695
  %v335 = vpow.pop %v334
  %v336 = vmul.f32 %v330, 1.442695
  %v337 = vpow.pop %v336
  %v338 = vmul.f32 %v331, 1.442695
  %v339 = vpow.pop %v338
  %v340 = vadd.f32 %v333, 1.0
  %v341 = vadd.f32 %v335, 1.0
  %v342 = vadd.f32 %v337, 1.0
  %v343 = vadd.f32 %v339, 1.0
  %v344 = vrcp.pop %v340
  %v345 = vrcp.pop %v341
  %v346 = vrcp.pop %v342
  %v347 = vrcp.pop %v343
  %v348 = vmul.f32 %v281, %v344
  %v349 = vmul.f32 %v283, %v345
  %v350 = vmul.f32 %v322, %v346
  %v351 = vmul.f32 %v324, %v347
  %v352 = vld [vmem:[%s2] sm:$0xff]
  %v353 = vpack.c.bf16 %v352, %v352
  %v354 = vld [vmem:[%s5] sm:$0xff]
  %v355 = vld [vmem:[%s5 + $0x8] sm:$0xff]
  %v356 = vld [vmem:[%s5 + $0x10] sm:$0xff]
  %v357 = vld [vmem:[%s5 + $0x18] sm:$0xff]
  %v358 = vld [vmem:[%s5 + $0x20] sm:$0xff]
  %v359 = vld [vmem:[%s5 + $0x28] sm:$0xff]
  %v360 = vld [vmem:[%s5 + $0x30] sm:$0xff]
  %v361 = vld [vmem:[%s5 + $0x38] sm:$0xff]
  %v362 = vld [vmem:[%s5 + $0x40] sm:$0xff]
  %v363 = vld [vmem:[%s5 + $0x48] sm:$0xff]
  %v364 = vld [vmem:[%s5 + $0x50] sm:$0xff]
  %v365 = vld [vmem:[%s5 + $0x58] sm:$0xff]
  %v366 = vld [vmem:[%s5 + $0x60] sm:$0xff]
  %v367 = vld [vmem:[%s5 + $0x68] sm:$0xff]
  %v368 = vld [vmem:[%s5 + $0x70] sm:$0xff]
  %v369 = vld [vmem:[%s5 + $0x78] sm:$0xff]
  %v370 = vld [vmem:[%s5 + $0x80] sm:$0xff]
  %v371 = vld [vmem:[%s5 + $0x88] sm:$0xff]
  %v372 = vld [vmem:[%s5 + $0x90] sm:$0xff]
  %v373 = vld [vmem:[%s5 + $0x98] sm:$0xff]
  %v374 = vld [vmem:[%s5 + $0xa0] sm:$0xff]
  %v375 = vld [vmem:[%s5 + $0xa8] sm:$0xff]
  %v376 = vld [vmem:[%s5 + $0xb0] sm:$0xff]
  %v377 = vld [vmem:[%s5 + $0xb8] sm:$0xff]
  %v378 = vld [vmem:[%s5 + $0xc0] sm:$0xff]
  %v379 = vld [vmem:[%s5 + $0xc8] sm:$0xff]
  %v380 = vld [vmem:[%s5 + $0xd0] sm:$0xff]
  %v381 = vld [vmem:[%s5 + $0xd8] sm:$0xff]
  %v382 = vld [vmem:[%s5 + $0xe0] sm:$0xff]
  %v383 = vld [vmem:[%s5 + $0xe8] sm:$0xff]
  %v384 = vld [vmem:[%s5 + $0xf0] sm:$0xff]
  %v385 = vld [vmem:[%s5 + $0xf8] sm:$0xff]
  %s386 = scalar_lea.vmem %s7, 1
  %v387 = vld [vmem:[%s386] ss:$8 sm:$0xf]
  %v389 = vlaneseq
  %v390 = vshrl.u32 %v389, 7
  %v391 = vsub.s32 0, %v390
  %v392 = vrot.slane %v387, %v391
  %v393 = vlaneseq
  %v394 = vshrl.u32 %v393, 7
  %v395 = vsub.s32 1, %v394
  %v396 = vrot.slane %v387, %v395
  %v397 = vlaneseq
  %v398 = vshrl.u32 %v397, 7
  %v399 = vsub.s32 2, %v398
  %v400 = vrot.slane %v387, %v399
  %v401 = vlaneseq
  %v402 = vshrl.u32 %v401, 7
  %v403 = vsub.s32 3, %v402
  %v404 = vrot.slane %v387, %v403
  %v441 = vunpack.c.l.b16 %v354
  %v442 = vunpack.c.h.b16 %v354
  %v443 = vunpack.c.l.b16 %v355
  %v444 = vunpack.c.h.b16 %v355
  %v445 = vunpack.c.l.b16 %v356
  %v446 = vunpack.c.h.b16 %v356
  %v447 = vunpack.c.l.b16 %v357
  %v448 = vunpack.c.h.b16 %v357
  %v449 = vunpack.c.l.b16 %v358
  %v450 = vunpack.c.h.b16 %v358
  %v451 = vunpack.c.l.b16 %v359
  %v452 = vunpack.c.h.b16 %v359
  %v453 = vunpack.c.l.b16 %v360
  %v454 = vunpack.c.h.b16 %v360
  %v455 = vunpack.c.l.b16 %v361
  %v456 = vunpack.c.h.b16 %v361
  %v457 = vunpack.c.l.b16 %v362
  %v458 = vunpack.c.h.b16 %v362
  %v459 = vunpack.c.l.b16 %v363
  %v460 = vunpack.c.h.b16 %v363
  %v461 = vunpack.c.l.b16 %v364
  %v462 = vunpack.c.h.b16 %v364
  %v463 = vunpack.c.l.b16 %v365
  %v464 = vunpack.c.h.b16 %v365
  %v465 = vunpack.c.l.b16 %v366
  %v466 = vunpack.c.h.b16 %v366
  %v467 = vunpack.c.l.b16 %v367
  %v468 = vunpack.c.h.b16 %v367
  %v469 = vunpack.c.l.b16 %v368
  %v470 = vunpack.c.h.b16 %v368
  %v471 = vunpack.c.l.b16 %v369
  %v472 = vunpack.c.h.b16 %v369
  %v473 = vunpack.c.l.b16 %v370
  %v474 = vunpack.c.h.b16 %v370
  %v475 = vunpack.c.l.b16 %v371
  %v476 = vunpack.c.h.b16 %v371
  %v477 = vunpack.c.l.b16 %v372
  %v478 = vunpack.c.h.b16 %v372
  %v479 = vunpack.c.l.b16 %v373
  %v480 = vunpack.c.h.b16 %v373
  %v481 = vunpack.c.l.b16 %v374
  %v482 = vunpack.c.h.b16 %v374
  %v483 = vunpack.c.l.b16 %v375
  %v484 = vunpack.c.h.b16 %v375
  %v485 = vunpack.c.l.b16 %v376
  %v486 = vunpack.c.h.b16 %v376
  %v487 = vunpack.c.l.b16 %v377
  %v488 = vunpack.c.h.b16 %v377
  %v489 = vunpack.c.l.b16 %v378
  %v490 = vunpack.c.h.b16 %v378
  %v491 = vunpack.c.l.b16 %v379
  %v492 = vunpack.c.h.b16 %v379
  %v493 = vunpack.c.l.b16 %v380
  %v494 = vunpack.c.h.b16 %v380
  %v495 = vunpack.c.l.b16 %v381
  %v496 = vunpack.c.h.b16 %v381
  %v497 = vunpack.c.l.b16 %v382
  %v498 = vunpack.c.h.b16 %v382
  %v499 = vunpack.c.l.b16 %v383
  %v500 = vunpack.c.h.b16 %v383
  %v501 = vunpack.c.l.b16 %v384
  %v502 = vunpack.c.h.b16 %v384
  %v503 = vunpack.c.l.b16 %v385
  %v504 = vunpack.c.h.b16 %v385
  %v505 = vpack.c.b16 %v445, %v441
  %v506 = vpack.c.b16 %v446, %v442
  %v507 = vpack.c.b16 %v447, %v443
  %v508 = vpack.c.b16 %v448, %v444
  %v509 = vpack.c.b16 %v453, %v449
  %v510 = vpack.c.b16 %v454, %v450
  %v511 = vpack.c.b16 %v455, %v451
  %v512 = vpack.c.b16 %v456, %v452
  %v513 = vpack.c.b16 %v461, %v457
  %v514 = vpack.c.b16 %v462, %v458
  %v515 = vpack.c.b16 %v463, %v459
  %v516 = vpack.c.b16 %v464, %v460
  %v517 = vpack.c.b16 %v469, %v465
  %v518 = vpack.c.b16 %v470, %v466
  %v519 = vpack.c.b16 %v471, %v467
  %v520 = vpack.c.b16 %v472, %v468
  %v521 = vpack.c.b16 %v477, %v473
  %v522 = vpack.c.b16 %v478, %v474
  %v523 = vpack.c.b16 %v479, %v475
  %v524 = vpack.c.b16 %v480, %v476
  %v525 = vpack.c.b16 %v485, %v481
  %v526 = vpack.c.b16 %v486, %v482
  %v527 = vpack.c.b16 %v487, %v483
  %v528 = vpack.c.b16 %v488, %v484
  %v529 = vpack.c.b16 %v493, %v489
  %v530 = vpack.c.b16 %v494, %v490
  %v531 = vpack.c.b16 %v495, %v491
  %v532 = vpack.c.b16 %v496, %v492
  %v533 = vpack.c.b16 %v501, %v497
  %v534 = vpack.c.b16 %v502, %v498
  %v535 = vpack.c.b16 %v503, %v499
  %v536 = vpack.c.b16 %v504, %v500
  %569 = vmatprep.subr.bf16.mxu0 %v506
  %570 = vmatpush1.bf16.msra.mxu0 %v505
  %571 = vmatprep.subr.bf16.mxu0 %v510
  %572 = vmatpush1.bf16.msra.mxu0 %v509
  %573 = vmatprep.subr.bf16.mxu0 %v514
  %574 = vmatpush1.bf16.msra.mxu0 %v513
  %575 = vmatprep.subr.bf16.mxu0 %v518
  %576 = vmatpush1.bf16.msra.mxu0 %v517
  %577 = vmatprep.subr.bf16.mxu0 %v522
  %578 = vmatpush1.bf16.msra.mxu0 %v521
  %579 = vmatprep.subr.bf16.mxu0 %v526
  %580 = vmatpush1.bf16.msra.mxu0 %v525
  %581 = vmatprep.subr.bf16.mxu0 %v530
  %582 = vmatpush1.bf16.msra.mxu0 %v529
  %583 = vmatprep.subr.bf16.mxu0 %v534
  %584 = vmatpush1.bf16.msra.mxu0 %v533
  %585 = vmatprep.subr.bf16.mxu0 0
  %586 = vmatpush1.bf16.msra.mxu0 0
  %587 = vmatprep.subr.bf16.mxu0 0
  %588 = vmatpush1.bf16.msra.mxu0 0
  %589 = vmatprep.subr.bf16.mxu0 0
  %590 = vmatpush1.bf16.msra.mxu0 0
  %591 = vmatprep.subr.bf16.mxu0 0
  %592 = vmatpush1.bf16.msra.mxu0 0
  %593 = vmatprep.subr.bf16.mxu0 0
  %594 = vmatpush1.bf16.msra.mxu0 0
  %595 = vmatprep.subr.bf16.mxu0 0
  %596 = vmatpush1.bf16.msra.mxu0 0
  %597 = vmatprep.subr.bf16.mxu0 0
  %598 = vmatpush1.bf16.msra.mxu0 0
  %599 = vmatprep.subr.bf16.mxu0 0
  %600 = vmatpush1.bf16.msra.mxu0 0
  %601 = vmatprep.mubr.bf16.mxu0 0
  %602 = vmatmul.mubr.bf16.gmra.mrb[0].mxu0 %v353
  %v603 = vpop.f32.mrb[0].mxu0
  %v604 = vadd.f32 %v392, %v603
  %v605 = vpop.f32.mrb[0].mxu0
  %v606 = vadd.f32 %v396, %v605
  %v607 = vpop.f32.mrb[0].mxu0
  %v608 = vpop.f32.mrb[0].mxu0
  %609 = vdwg.mxu0
  %610 = vmatprep.subr.bf16.mxu0 %v508
  %611 = vmatpush1.bf16.msra.mxu0 %v507
  %612 = vmatprep.subr.bf16.mxu0 %v512
  %613 = vmatpush1.bf16.msra.mxu0 %v511
  %614 = vmatprep.subr.bf16.mxu0 %v516
  %615 = vmatpush1.bf16.msra.mxu0 %v515
  %616 = vmatprep.subr.bf16.mxu0 %v520
  %617 = vmatpush1.bf16.msra.mxu0 %v519
  %618 = vmatprep.subr.bf16.mxu0 %v524
  %619 = vmatpush1.bf16.msra.mxu0 %v523
  %620 = vmatprep.subr.bf16.mxu0 %v528
  %621 = vmatpush1.bf16.msra.mxu0 %v527
  %622 = vmatprep.subr.bf16.mxu0 %v532
  %623 = vmatpush1.bf16.msra.mxu0 %v531
  %624 = vmatprep.subr.bf16.mxu0 %v536
  %625 = vmatpush1.bf16.msra.mxu0 %v535
  %626 = vmatprep.subr.bf16.mxu0 0
  %627 = vmatpush1.bf16.msra.mxu0 0
  %628 = vmatprep.subr.bf16.mxu0 0
  %629 = vmatpush1.bf16.msra.mxu0 0
  %630 = vmatprep.subr.bf16.mxu0 0
  %631 = vmatpush1.bf16.msra.mxu0 0
  %632 = vmatprep.subr.bf16.mxu0 0
  %633 = vmatpush1.bf16.msra.mxu0 0
  %634 = vmatprep.subr.bf16.mxu0 0
  %635 = vmatpush1.bf16.msra.mxu0 0
  %636 = vmatprep.subr.bf16.mxu0 0
  %637 = vmatpush1.bf16.msra.mxu0 0
  %638 = vmatprep.subr.bf16.mxu0 0
  %639 = vmatpush1.bf16.msra.mxu0 0
  %640 = vmatprep.subr.bf16.mxu0 0
  %641 = vmatpush1.bf16.msra.mxu0 0
  %642 = vmatprep.mubr.bf16.mxu0 0
  %643 = vmatmul.mubr.bf16.gmra.mrb[0].mxu0 %v353
  %v644 = vpop.f32.mrb[0].mxu0
  %v645 = vadd.f32 %v400, %v644
  %v646 = vpop.f32.mrb[0].mxu0
  %v647 = vadd.f32 %v404, %v646
  %v648 = vpop.f32.mrb[0].mxu0
  %v649 = vpop.f32.mrb[0].mxu0
  %650 = vdwg.mxu0
  %v651 = vpack.c.bf16 %v348, %v348
  %s652 = scalar_lea.vmem %s3, 64
  %v653 = vld [vmem:[%s652] sm:$0xf]
  %v654 = vld [vmem:[%s652 + $0x4] sm:$0xf]
  %v655 = vld [vmem:[%s652 + $0x8] sm:$0xf]
  %v656 = vld [vmem:[%s652 + $0xc] sm:$0xf]
  %v657 = vld [vmem:[%s652 + $0x10] sm:$0xf]
  %v658 = vld [vmem:[%s652 + $0x14] sm:$0xf]
  %v659 = vld [vmem:[%s652 + $0x18] sm:$0xf]
  %v660 = vld [vmem:[%s652 + $0x1c] sm:$0xf]
  %v661 = vld [vmem:[%s652 + $0x20] sm:$0xf]
  %v662 = vld [vmem:[%s652 + $0x24] sm:$0xf]
  %v663 = vld [vmem:[%s652 + $0x28] sm:$0xf]
  %v664 = vld [vmem:[%s652 + $0x2c] sm:$0xf]
  %v665 = vld [vmem:[%s652 + $0x30] sm:$0xf]
  %v666 = vld [vmem:[%s652 + $0x34] sm:$0xf]
  %v667 = vld [vmem:[%s652 + $0x38] sm:$0xf]
  %v668 = vld [vmem:[%s652 + $0x3c] sm:$0xf]
  %v669 = vld [vmem:[%s6 + $0x3] sm:$0x1]
  %v670 = vlaneseq
  %v671 = vshrl.u32 %v670, 7
  %v672 = vsub.s32 0, %v671
  %v673 = vrot.slane %v669, %v672
  %v690 = vunpack.c.l.b16 %v653
  %v691 = vunpack.c.l.b16 %v654
  %v692 = vunpack.c.l.b16 %v655
  %v693 = vunpack.c.l.b16 %v656
  %v694 = vunpack.c.l.b16 %v657
  %v695 = vunpack.c.l.b16 %v658
  %v696 = vunpack.c.l.b16 %v659
  %v697 = vunpack.c.l.b16 %v660
  %v698 = vunpack.c.l.b16 %v661
  %v699 = vunpack.c.l.b16 %v662
  %v700 = vunpack.c.l.b16 %v663
  %v701 = vunpack.c.l.b16 %v664
  %v702 = vunpack.c.l.b16 %v665
  %v703 = vunpack.c.l.b16 %v666
  %v704 = vunpack.c.l.b16 %v667
  %v705 = vunpack.c.l.b16 %v668
  %v706 = vpack.c.b16 %v691, %v690
  %v707 = vpack.c.b16 %v693, %v692
  %v708 = vpack.c.b16 %v695, %v694
  %v709 = vpack.c.b16 %v697, %v696
  %v710 = vpack.c.b16 %v699, %v698
  %v711 = vpack.c.b16 %v701, %v700
  %v712 = vpack.c.b16 %v703, %v702
  %v713 = vpack.c.b16 %v705, %v704
  %722 = vmatprep.subr.bf16.mxu0 0
  %723 = vmatpush1.bf16.msra.mxu0 %v706
  %724 = vmatprep.subr.bf16.mxu0 0
  %725 = vmatpush1.bf16.msra.mxu0 %v707
  %726 = vmatprep.subr.bf16.mxu0 0
  %727 = vmatpush1.bf16.msra.mxu0 %v708
  %728 = vmatprep.subr.bf16.mxu0 0
  %729 = vmatpush1.bf16.msra.mxu0 %v709
  %730 = vmatprep.subr.bf16.mxu0 0
  %731 = vmatpush1.bf16.msra.mxu0 %v710
  %732 = vmatprep.subr.bf16.mxu0 0
  %733 = vmatpush1.bf16.msra.mxu0 %v711
  %734 = vmatprep.subr.bf16.mxu0 0
  %735 = vmatpush1.bf16.msra.mxu0 %v712
  %736 = vmatprep.subr.bf16.mxu0 0
  %737 = vmatpush1.bf16.msra.mxu0 %v713
  %738 = vmatprep.subr.bf16.mxu0 0
  %739 = vmatpush1.bf16.msra.mxu0 0
  %740 = vmatprep.subr.bf16.mxu0 0
  %741 = vmatpush1.bf16.msra.mxu0 0
  %742 = vmatprep.subr.bf16.mxu0 0
  %743 = vmatpush1.bf16.msra.mxu0 0
  %744 = vmatprep.subr.bf16.mxu0 0
  %745 = vmatpush1.bf16.msra.mxu0 0
  %746 = vmatprep.subr.bf16.mxu0 0
  %747 = vmatpush1.bf16.msra.mxu0 0
  %748 = vmatprep.subr.bf16.mxu0 0
  %749 = vmatpush1.bf16.msra.mxu0 0
  %750 = vmatprep.subr.bf16.mxu0 0
  %751 = vmatpush1.bf16.msra.mxu0 0
  %752 = vmatprep.subr.bf16.mxu0 0
  %753 = vmatpush1.bf16.msra.mxu0 0
  %754 = vmatprep.mubr.bf16.mxu0 0
  %755 = vmatmul.mubr.bf16.gmra.mrb[0].mxu0 %v651
  %v756 = vpop.f32.mrb[0].mxu0
  %v757 = vadd.f32 %v673, %v756
  %v758 = vpop.f32.mrb[0].mxu0
  %v759 = vpop.f32.mrb[0].mxu0
  %v760 = vpop.f32.mrb[0].mxu0
  %761 = vdwg.mxu0
  %v762 = vadd.f32 %v757, %v604
  %763 = vst [vmem:[#allocation3] sm:$0xff] %v762
  %v764 = vpack.c.bf16 %v349, %v349
  %s765 = scalar_lea.vmem %s3, 128
  %v766 = vld [vmem:[%s765] sm:$0xf]
  %v767 = vld [vmem:[%s765 + $0x4] sm:$0xf]
  %v768 = vld [vmem:[%s765 + $0x8] sm:$0xf]
  %v769 = vld [vmem:[%s765 + $0xc] sm:$0xf]
  %v770 = vld [vmem:[%s765 + $0x10] sm:$0xf]
  %v771 = vld [vmem:[%s765 + $0x14] sm:$0xf]
  %v772 = vld [vmem:[%s765 + $0x18] sm:$0xf]
  %v773 = vld [vmem:[%s765 + $0x1c] sm:$0xf]
  %v774 = vld [vmem:[%s765 + $0x20] sm:$0xf]
  %v775 = vld [vmem:[%s765 + $0x24] sm:$0xf]
  %v776 = vld [vmem:[%s765 + $0x28] sm:$0xf]
  %v777 = vld [vmem:[%s765 + $0x2c] sm:$0xf]
  %v778 = vld [vmem:[%s765 + $0x30] sm:$0xf]
  %v779 = vld [vmem:[%s765 + $0x34] sm:$0xf]
  %v780 = vld [vmem:[%s765 + $0x38] sm:$0xf]
  %v781 = vld [vmem:[%s765 + $0x3c] sm:$0xf]
  %v782 = vld [vmem:[%s6 + $0x4] sm:$0x1]
  %v783 = vlaneseq
  %v784 = vshrl.u32 %v783, 7
  %v785 = vsub.s32 0, %v784
  %v786 = vrot.slane %v782, %v785
  %v803 = vunpack.c.l.b16 %v766
  %v804 = vunpack.c.l.b16 %v767
  %v805 = vunpack.c.l.b16 %v768
  %v806 = vunpack.c.l.b16 %v769
  %v807 = vunpack.c.l.b16 %v770
  %v808 = vunpack.c.l.b16 %v771
  %v809 = vunpack.c.l.b16 %v772
  %v810 = vunpack.c.l.b16 %v773
  %v811 = vunpack.c.l.b16 %v774
  %v812 = vunpack.c.l.b16 %v775
  %v813 = vunpack.c.l.b16 %v776
  %v814 = vunpack.c.l.b16 %v777
  %v815 = vunpack.c.l.b16 %v778
  %v816 = vunpack.c.l.b16 %v779
  %v817 = vunpack.c.l.b16 %v780
  %v818 = vunpack.c.l.b16 %v781
  %v819 = vpack.c.b16 %v804, %v803
  %v820 = vpack.c.b16 %v806, %v805
  %v821 = vpack.c.b16 %v808, %v807
  %v822 = vpack.c.b16 %v810, %v809
  %v823 = vpack.c.b16 %v812, %v811
  %v824 = vpack.c.b16 %v814, %v813
  %v825 = vpack.c.b16 %v816, %v815
  %v826 = vpack.c.b16 %v818, %v817
  %835 = vmatprep.subr.bf16.mxu0 0
  %836 = vmatpush1.bf16.msra.mxu0 %v819
  %837 = vmatprep.subr.bf16.mxu0 0
  %838 = vmatpush1.bf16.msra.mxu0 %v820
  %839 = vmatprep.subr.bf16.mxu0 0
  %840 = vmatpush1.bf16.msra.mxu0 %v821
  %841 = vmatprep.subr.bf16.mxu0 0
  %842 = vmatpush1.bf16.msra.mxu0 %v822
  %843 = vmatprep.subr.bf16.mxu0 0
  %844 = vmatpush1.bf16.msra.mxu0 %v823
  %845 = vmatprep.subr.bf16.mxu0 0
  %846 = vmatpush1.bf16.msra.mxu0 %v824
  %847 = vmatprep.subr.bf16.mxu0 0
  %848 = vmatpush1.bf16.msra.mxu0 %v825
  %849 = vmatprep.subr.bf16.mxu0 0
  %850 = vmatpush1.bf16.msra.mxu0 %v826
  %851 = vmatprep.subr.bf16.mxu0 0
  %852 = vmatpush1.bf16.msra.mxu0 0
  %853 = vmatprep.subr.bf16.mxu0 0
  %854 = vmatpush1.bf16.msra.mxu0 0
  %855 = vmatprep.subr.bf16.mxu0 0
  %856 = vmatpush1.bf16.msra.mxu0 0
  %857 = vmatprep.subr.bf16.mxu0 0
  %858 = vmatpush1.bf16.msra.mxu0 0
  %859 = vmatprep.subr.bf16.mxu0 0
  %860 = vmatpush1.bf16.msra.mxu0 0
  %861 = vmatprep.subr.bf16.mxu0 0
  %862 = vmatpush1.bf16.msra.mxu0 0
  %863 = vmatprep.subr.bf16.mxu0 0
  %864 = vmatpush1.bf16.msra.mxu0 0
  %865 = vmatprep.subr.bf16.mxu0 0
  %866 = vmatpush1.bf16.msra.mxu0 0
  %867 = vmatprep.mubr.bf16.mxu0 0
  %868 = vmatmul.mubr.bf16.gmra.mrb[0].mxu0 %v764
  %v869 = vpop.f32.mrb[0].mxu0
  %v870 = vadd.f32 %v786, %v869
  %v871 = vpop.f32.mrb[0].mxu0
  %v872 = vpop.f32.mrb[0].mxu0
  %v873 = vpop.f32.mrb[0].mxu0
  %874 = vdwg.mxu0
  %v875 = vadd.f32 %v870, %v606
  %s876 = scalar_lea.vmem [#allocation3], 8
  %877 = vst [vmem:[%s876] sm:$0xff] %v875
  %v878 = vpack.c.bf16 %v350, %v350
  %s879 = scalar_lea.vmem %s3, 192
  %v880 = vld [vmem:[%s879] sm:$0xf]
  %v881 = vld [vmem:[%s879 + $0x4] sm:$0xf]
  %v882 = vld [vmem:[%s879 + $0x8] sm:$0xf]
  %v883 = vld [vmem:[%s879 + $0xc] sm:$0xf]
  %v884 = vld [vmem:[%s879 + $0x10] sm:$0xf]
  %v885 = vld [vmem:[%s879 + $0x14] sm:$0xf]
  %v886 = vld [vmem:[%s879 + $0x18] sm:$0xf]
  %v887 = vld [vmem:[%s879 + $0x1c] sm:$0xf]
  %v888 = vld [vmem:[%s879 + $0x20] sm:$0xf]
  %v889 = vld [vmem:[%s879 + $0x24] sm:$0xf]
  %v890 = vld [vmem:[%s879 + $0x28] sm:$0xf]
  %v891 = vld [vmem:[%s879 + $0x2c] sm:$0xf]
  %v892 = vld [vmem:[%s879 + $0x30] sm:$0xf]
  %v893 = vld [vmem:[%s879 + $0x34] sm:$0xf]
  %v894 = vld [vmem:[%s879 + $0x38] sm:$0xf]
  %v895 = vld [vmem:[%s879 + $0x3c] sm:$0xf]
  %v896 = vld [vmem:[%s6 + $0x5] sm:$0x1]
  %v897 = vlaneseq
  %v898 = vshrl.u32 %v897, 7
  %v899 = vsub.s32 0, %v898
  %v900 = vrot.slane %v896, %v899
  %v917 = vunpack.c.l.b16 %v880
  %v918 = vunpack.c.l.b16 %v881
  %v919 = vunpack.c.l.b16 %v882
  %v920 = vunpack.c.l.b16 %v883
  %v921 = vunpack.c.l.b16 %v884
  %v922 = vunpack.c.l.b16 %v885
  %v923 = vunpack.c.l.b16 %v886
  %v924 = vunpack.c.l.b16 %v887
  %v925 = vunpack.c.l.b16 %v888
  %v926 = vunpack.c.l.b16 %v889
  %v927 = vunpack.c.l.b16 %v890
  %v928 = vunpack.c.l.b16 %v891
  %v929 = vunpack.c.l.b16 %v892
  %v930 = vunpack.c.l.b16 %v893
  %v931 = vunpack.c.l.b16 %v894
  %v932 = vunpack.c.l.b16 %v895
  %v933 = vpack.c.b16 %v918, %v917
  %v934 = vpack.c.b16 %v920, %v919
  %v935 = vpack.c.b16 %v922, %v921
  %v936 = vpack.c.b16 %v924, %v923
  %v937 = vpack.c.b16 %v926, %v925
  %v938 = vpack.c.b16 %v928, %v927
  %v939 = vpack.c.b16 %v930, %v929
  %v940 = vpack.c.b16 %v932, %v931
  %949 = vmatprep.subr.bf16.mxu0 0
  %950 = vmatpush1.bf16.msra.mxu0 %v933
  %951 = vmatprep.subr.bf16.mxu0 0
  %952 = vmatpush1.bf16.msra.mxu0 %v934
  %953 = vmatprep.subr.bf16.mxu0 0
  %954 = vmatpush1.bf16.msra.mxu0 %v935
  %955 = vmatprep.subr.bf16.mxu0 0
  %956 = vmatpush1.bf16.msra.mxu0 %v936
  %957 = vmatprep.subr.bf16.mxu0 0
  %958 = vmatpush1.bf16.msra.mxu0 %v937
  %959 = vmatprep.subr.bf16.mxu0 0
  %960 = vmatpush1.bf16.msra.mxu0 %v938
  %961 = vmatprep.subr.bf16.mxu0 0
  %962 = vmatpush1.bf16.msra.mxu0 %v939
  %963 = vmatprep.subr.bf16.mxu0 0
  %964 = vmatpush1.bf16.msra.mxu0 %v940
  %965 = vmatprep.subr.bf16.mxu0 0
  %966 = vmatpush1.bf16.msra.mxu0 0
  %967 = vmatprep.subr.bf16.mxu0 0
  %968 = vmatpush1.bf16.msra.mxu0 0
  %969 = vmatprep.subr.bf16.mxu0 0
  %970 = vmatpush1.bf16.msra.mxu0 0
  %971 = vmatprep.subr.bf16.mxu0 0
  %972 = vmatpush1.bf16.msra.mxu0 0
  %973 = vmatprep.subr.bf16.mxu0 0
  %974 = vmatpush1.bf16.msra.mxu0 0
  %975 = vmatprep.subr.bf16.mxu0 0
  %976 = vmatpush1.bf16.msra.mxu0 0
  %977 = vmatprep.subr.bf16.mxu0 0
  %978 = vmatpush1.bf16.msra.mxu0 0
  %979 = vmatprep.subr.bf16.mxu0 0
  %980 = vmatpush1.bf16.msra.mxu0 0
  %981 = vmatprep.mubr.bf16.mxu0 0
  %982 = vmatmul.mubr.bf16.gmra.mrb[0].mxu0 %v878
  %v983 = vpop.f32.mrb[0].mxu0
  %v984 = vadd.f32 %v900, %v983
  %v985 = vpop.f32.mrb[0].mxu0
  %v986 = vpop.f32.mrb[0].mxu0
  %v987 = vpop.f32.mrb[0].mxu0
  %988 = vdwg.mxu0
  %v989 = vadd.f32 %v984, %v645
  %s990 = scalar_lea.vmem [#allocation3], 16
  %991 = vst [vmem:[%s990] sm:$0xff] %v989
  %v992 = vpack.c.bf16 %v351, %v351
  %s993 = scalar_lea.vmem %s3, 256
  %v994 = vld [vmem:[%s993] sm:$0xf]
  %v995 = vld [vmem:[%s993 + $0x4] sm:$0xf]
  %v996 = vld [vmem:[%s993 + $0x8] sm:$0xf]
  %v997 = vld [vmem:[%s993 + $0xc] sm:$0xf]
  %v998 = vld [vmem:[%s993 + $0x10] sm:$0xf]
  %v999 = vld [vmem:[%s993 + $0x14] sm:$0xf]
  %v1000 = vld [vmem:[%s993 + $0x18] sm:$0xf]
  %v1001 = vld [vmem:[%s993 + $0x1c] sm:$0xf]
  %v1002 = vld [vmem:[%s993 + $0x20] sm:$0xf]
  %v1003 = vld [vmem:[%s993 + $0x24] sm:$0xf]
  %v1004 = vld [vmem:[%s993 + $0x28] sm:$0xf]
  %v1005 = vld [vmem:[%s993 + $0x2c] sm:$0xf]
  %v1006 = vld [vmem:[%s993 + $0x30] sm:$0xf]
  %v1007 = vld [vmem:[%s993 + $0x34] sm:$0xf]
  %v1008 = vld [vmem:[%s993 + $0x38] sm:$0xf]
  %v1009 = vld [vmem:[%s993 + $0x3c] sm:$0xf]
  %v1010 = vld [vmem:[%s6 + $0x6] sm:$0x1]
  %v1011 = vlaneseq
  %v1012 = vshrl.u32 %v1011, 7
  %v1013 = vsub.s32 0, %v1012
  %v1014 = vrot.slane %v1010, %v1013
  %v1031 = vunpack.c.l.b16 %v994
  %v1032 = vunpack.c.l.b16 %v995
  %v1033 = vunpack.c.l.b16 %v996
  %v1034 = vunpack.c.l.b16 %v997
  %v1035 = vunpack.c.l.b16 %v998
  %v1036 = vunpack.c.l.b16 %v999
  %v1037 = vunpack.c.l.b16 %v1000
  %v1038 = vunpack.c.l.b16 %v1001
  %v1039 = vunpack.c.l.b16 %v1002
  %v1040 = vunpack.c.l.b16 %v1003
  %v1041 = vunpack.c.l.b16 %v1004
  %v1042 = vunpack.c.l.b16 %v1005
  %v1043 = vunpack.c.l.b16 %v1006
  %v1044 = vunpack.c.l.b16 %v1007
  %v1045 = vunpack.c.l.b16 %v1008
  %v1046 = vunpack.c.l.b16 %v1009
  %v1047 = vpack.c.b16 %v1032, %v1031
  %v1048 = vpack.c.b16 %v1034, %v1033
  %v1049 = vpack.c.b16 %v1036, %v1035
  %v1050 = vpack.c.b16 %v1038, %v1037
  %v1051 = vpack.c.b16 %v1040, %v1039
  %v1052 = vpack.c.b16 %v1042, %v1041
  %v1053 = vpack.c.b16 %v1044, %v1043
  %v1054 = vpack.c.b16 %v1046, %v1045
  %1063 = vmatprep.subr.bf16.mxu0 0
  %1064 = vmatpush1.bf16.msra.mxu0 %v1047
  %1065 = vmatprep.subr.bf16.mxu0 0
  %1066 = vmatpush1.bf16.msra.mxu0 %v1048
  %1067 = vmatprep.subr.bf16.mxu0 0
  %1068 = vmatpush1.bf16.msra.mxu0 %v1049
  %1069 = vmatprep.subr.bf16.mxu0 0
  %1070 = vmatpush1.bf16.msra.mxu0 %v1050
  %1071 = vmatprep.subr.bf16.mxu0 0
  %1072 = vmatpush1.bf16.msra.mxu0 %v1051
  %1073 = vmatprep.subr.bf16.mxu0 0
  %1074 = vmatpush1.bf16.msra.mxu0 %v1052
  %1075 = vmatprep.subr.bf16.mxu0 0
  %1076 = vmatpush1.bf16.msra.mxu0 %v1053
  %1077 = vmatprep.subr.bf16.mxu0 0
  %1078 = vmatpush1.bf16.msra.mxu0 %v1054
  %1079 = vmatprep.subr.bf16.mxu0 0
  %1080 = vmatpush1.bf16.msra.mxu0 0
  %1081 = vmatprep.subr.bf16.mxu0 0
  %1082 = vmatpush1.bf16.msra.mxu0 0
  %1083 = vmatprep.subr.bf16.mxu0 0
  %1084 = vmatpush1.bf16.msra.mxu0 0
  %1085 = vmatprep.subr.bf16.mxu0 0
  %1086 = vmatpush1.bf16.msra.mxu0 0
  %1087 = vmatprep.subr.bf16.mxu0 0
  %1088 = vmatpush1.bf16.msra.mxu0 0
  %1089 = vmatprep.subr.bf16.mxu0 0
  %1090 = vmatpush1.bf16.msra.mxu0 0
  %1091 = vmatprep.subr.bf16.mxu0 0
  %1092 = vmatpush1.bf16.msra.mxu0 0
  %1093 = vmatprep.subr.bf16.mxu0 0
  %1094 = vmatpush1.bf16.msra.mxu0 0
  %1095 = vmatprep.mubr.bf16.mxu0 0
  %1096 = vmatmul.mubr.bf16.gmra.mrb[0].mxu0 %v992
  %v1097 = vpop.f32.mrb[0].mxu0
  %v1098 = vadd.f32 %v1014, %v1097
  %v1099 = vpop.f32.mrb[0].mxu0
  %v1100 = vpop.f32.mrb[0].mxu0
  %v1101 = vpop.f32.mrb[0].mxu0
  %1102 = vdwg.mxu0
  %v1103 = vadd.f32 %v1098, %v647
  %s1104 = scalar_lea.vmem [#allocation3], 24
  %1105 = vst [vmem:[%s1104] sm:$0xff] %v1103
  %v1106 = vld [vmem:[%s0] sm:$0xff]
  %v1107 = vpack.c.bf16 %v1106, %v1106
  %v1108 = vld [vmem:[%s3] sm:$0xf]
  %v1109 = vld [vmem:[%s3 + $0x4] sm:$0xf]
  %v1110 = vld [vmem:[%s3 + $0x8] sm:$0xf]
  %v1111 = vld [vmem:[%s3 + $0xc] sm:$0xf]
  %v1112 = vld [vmem:[%s3 + $0x10] sm:$0xf]
  %v1113 = vld [vmem:[%s3 + $0x14] sm:$0xf]
  %v1114 = vld [vmem:[%s3 + $0x18] sm:$0xf]
  %v1115 = vld [vmem:[%s3 + $0x1c] sm:$0xf]
  %v1116 = vld [vmem:[%s3 + $0x20] sm:$0xf]
  %v1117 = vld [vmem:[%s3 + $0x24] sm:$0xf]
  %v1118 = vld [vmem:[%s3 + $0x28] sm:$0xf]
  %v1119 = vld [vmem:[%s3 + $0x2c] sm:$0xf]
  %v1120 = vld [vmem:[%s3 + $0x30] sm:$0xf]
  %v1121 = vld [vmem:[%s3 + $0x34] sm:$0xf]
  %v1122 = vld [vmem:[%s3 + $0x38] sm:$0xf]
  %v1123 = vld [vmem:[%s3 + $0x3c] sm:$0xf]
  %v1124 = vld [vmem:[%s6] sm:$0x1]
  %v1125 = vlaneseq
  %v1126 = vshrl.u32 %v1125, 7
  %v1127 = vsub.s32 0, %v1126
  %v1128 = vrot.slane %v1124, %v1127
  %v1145 = vunpack.c.l.b16 %v1108
  %v1146 = vunpack.c.l.b16 %v1109
  %v1147 = vunpack.c.l.b16 %v1110
  %v1148 = vunpack.c.l.b16 %v1111
  %v1149 = vunpack.c.l.b16 %v1112
  %v1150 = vunpack.c.l.b16 %v1113
  %v1151 = vunpack.c.l.b16 %v1114
  %v1152 = vunpack.c.l.b16 %v1115
  %v1153 = vunpack.c.l.b16 %v1116
  %v1154 = vunpack.c.l.b16 %v1117
  %v1155 = vunpack.c.l.b16 %v1118
  %v1156 = vunpack.c.l.b16 %v1119
  %v1157 = vunpack.c.l.b16 %v1120
  %v1158 = vunpack.c.l.b16 %v1121
  %v1159 = vunpack.c.l.b16 %v1122
  %v1160 = vunpack.c.l.b16 %v1123
  %v1161 = vpack.c.b16 %v1146, %v1145
  %v1162 = vpack.c.b16 %v1148, %v1147
  %v1163 = vpack.c.b16 %v1150, %v1149
  %v1164 = vpack.c.b16 %v1152, %v1151
  %v1165 = vpack.c.b16 %v1154, %v1153
  %v1166 = vpack.c.b16 %v1156, %v1155
  %v1167 = vpack.c.b16 %v1158, %v1157
  %v1168 = vpack.c.b16 %v1160, %v1159
  %1177 = vmatprep.subr.bf16.mxu0 0
  %1178 = vmatpush1.bf16.msra.mxu0 %v1161
  %1179 = vmatprep.subr.bf16.mxu0 0
  %1180 = vmatpush1.bf16.msra.mxu0 %v1162
  %1181 = vmatprep.subr.bf16.mxu0 0
  %1182 = vmatpush1.bf16.msra.mxu0 %v1163
  %1183 = vmatprep.subr.bf16.mxu0 0
  %1184 = vmatpush1.bf16.msra.mxu0 %v1164
  %1185 = vmatprep.subr.bf16.mxu0 0
  %1186 = vmatpush1.bf16.msra.mxu0 %v1165
  %1187 = vmatprep.subr.bf16.mxu0 0
  %1188 = vmatpush1.bf16.msra.mxu0 %v1166
  %1189 = vmatprep.subr.bf16.mxu0 0
  %1190 = vmatpush1.bf16.msra.mxu0 %v1167
  %1191 = vmatprep.subr.bf16.mxu0 0
  %1192 = vmatpush1.bf16.msra.mxu0 %v1168
  %1193 = vmatprep.subr.bf16.mxu0 0
  %1194 = vmatpush1.bf16.msra.mxu0 0
  %1195 = vmatprep.subr.bf16.mxu0 0
  %1196 = vmatpush1.bf16.msra.mxu0 0
  %1197 = vmatprep.subr.bf16.mxu0 0
  %1198 = vmatpush1.bf16.msra.mxu0 0
  %1199 = vmatprep.subr.bf16.mxu0 0
  %1200 = vmatpush1.bf16.msra.mxu0 0
  %1201 = vmatprep.subr.bf16.mxu0 0
  %1202 = vmatpush1.bf16.msra.mxu0 0
  %1203 = vmatprep.subr.bf16.mxu0 0
  %1204 = vmatpush1.bf16.msra.mxu0 0
  %1205 = vmatprep.subr.bf16.mxu0 0
  %1206 = vmatpush1.bf16.msra.mxu0 0
  %1207 = vmatprep.subr.bf16.mxu0 0
  %1208 = vmatpush1.bf16.msra.mxu0 0
  %1209 = vmatprep.mubr.bf16.mxu0 0
  %1210 = vmatmul.mubr.bf16.gmra.mrb[0].mxu0 %v1107
  %v1211 = vpop.f32.mrb[0].mxu0
  %v1212 = vadd.f32 %v1128, %v1211
  %v1213 = vpop.f32.mrb[0].mxu0
  %v1214 = vpop.f32.mrb[0].mxu0
  %v1215 = vpop.f32.mrb[0].mxu0
  %1216 = vdwg.mxu0
  %v1217 = vlaneseq
  %v1218 = vand.u32 %v1217, 127
  %vm1219 = vcmp.lt.s32.totalorder %v1218, 64
  %1220 = vadd.xlane.f32.xlu0 %v1212
  %v1221 = vpop.xlane.xlu0 %1220
  %v1222 = vmul.f32 %v1221, 0.015625
  %v1223 = vsub.f32 %v1212, %v1222
  %v1224 = vsel %vm1219, 1, 0
  %vm1225 = vcmp.eq.s32.totalorder %v1224, 1
  %v1226 = vsel %vm1225, %v1223, 0.0
  %v1227 = vmul.f32 %v1226, %v1226
  %1228 = vadd.xlane.f32.xlu0 %v1227
  %v1229 = vpop.xlane.xlu0 %1228
  %v1230 = vmul.f32 %v1229, 0.015625
  %v1231 = vadd.f32 %v1230, 1e-05
  %v1232 = vrsqrt.pop %v1231
  %v1233 = vmul.f32 %v1226, %v1232
  %v1234 = vld [vmem:[%s6 + $0x1] sm:$0x1]
  %v1235 = vlaneseq
  %v1236 = vshrl.u32 %v1235, 7
  %v1237 = vsub.s32 0, %v1236
  %v1238 = vrot.slane %v1234, %v1237
  %v1239 = vmul.f32 %v1233, %v1238
  %v1240 = vld [vmem:[%s6 + $0x2] sm:$0x1]
  %v1241 = vlaneseq
  %v1242 = vshrl.u32 %v1241, 7
  %v1243 = vsub.s32 0, %v1242
  %v1244 = vrot.slane %v1240, %v1243
  %v1245 = vadd.f32 %v1239, %v1244
  %v1246 = vsub.f32 0.0, %v1245
  %v1247 = vmul.f32 %v1246, 1.442695
  %v1248 = vpow.pop %v1247
  %v1249 = vadd.f32 %v1248, 1.0
  %v1250 = vrcp.pop %v1249
  %v1251 = vmul.f32 %v1245, %v1250
  %1252 = vst [vmem:[#allocation2] sm:$0xff] %v1251
  %v1253 = vld [vmem:[#allocation3] sm:$0xff]
  %v1254 = vadd.f32 %v1251, %v1253
  %v1255 = vpack.c.bf16 %v1254, %v1254
  %s1256 = scalar_lea.vmem %s3, 320
  %v1257 = vld [vmem:[%s1256] sm:$0xf]
  %v1258 = vld [vmem:[%s1256 + $0x4] sm:$0xf]
  %v1259 = vld [vmem:[%s1256 + $0x8] sm:$0xf]
  %v1260 = vld [vmem:[%s1256 + $0xc] sm:$0xf]
  %v1261 = vld [vmem:[%s1256 + $0x10] sm:$0xf]
  %v1262 = vld [vmem:[%s1256 + $0x14] sm:$0xf]
  %v1263 = vld [vmem:[%s1256 + $0x18] sm:$0xf]
  %v1264 = vld [vmem:[%s1256 + $0x1c] sm:$0xf]
  %v1265 = vld [vmem:[%s1256 + $0x20] sm:$0xf]
  %v1266 = vld [vmem:[%s1256 + $0x24] sm:$0xf]
  %v1267 = vld [vmem:[%s1256 + $0x28] sm:$0xf]
  %v1268 = vld [vmem:[%s1256 + $0x2c] sm:$0xf]
  %v1269 = vld [vmem:[%s1256 + $0x30] sm:$0xf]
  %v1270 = vld [vmem:[%s1256 + $0x34] sm:$0xf]
  %v1271 = vld [vmem:[%s1256 + $0x38] sm:$0xf]
  %v1272 = vld [vmem:[%s1256 + $0x3c] sm:$0xf]
  %v1273 = vld [vmem:[%s6 + $0x7] sm:$0x1]
  %v1274 = vlaneseq
  %v1275 = vshrl.u32 %v1274, 7
  %v1276 = vsub.s32 0, %v1275
  %v1277 = vrot.slane %v1273, %v1276
  %v1294 = vunpack.c.l.b16 %v1257
  %v1295 = vunpack.c.l.b16 %v1258
  %v1296 = vunpack.c.l.b16 %v1259
  %v1297 = vunpack.c.l.b16 %v1260
  %v1298 = vunpack.c.l.b16 %v1261
  %v1299 = vunpack.c.l.b16 %v1262
  %v1300 = vunpack.c.l.b16 %v1263
  %v1301 = vunpack.c.l.b16 %v1264
  %v1302 = vunpack.c.l.b16 %v1265
  %v1303 = vunpack.c.l.b16 %v1266
  %v1304 = vunpack.c.l.b16 %v1267
  %v1305 = vunpack.c.l.b16 %v1268
  %v1306 = vunpack.c.l.b16 %v1269
  %v1307 = vunpack.c.l.b16 %v1270
  %v1308 = vunpack.c.l.b16 %v1271
  %v1309 = vunpack.c.l.b16 %v1272
  %v1310 = vpack.c.b16 %v1295, %v1294
  %v1311 = vpack.c.b16 %v1297, %v1296
  %v1312 = vpack.c.b16 %v1299, %v1298
  %v1313 = vpack.c.b16 %v1301, %v1300
  %v1314 = vpack.c.b16 %v1303, %v1302
  %v1315 = vpack.c.b16 %v1305, %v1304
  %v1316 = vpack.c.b16 %v1307, %v1306
  %v1317 = vpack.c.b16 %v1309, %v1308
  %1326 = vmatprep.subr.bf16.mxu0 0
  %1327 = vmatpush1.bf16.msra.mxu0 %v1310
  %1328 = vmatprep.subr.bf16.mxu0 0
  %1329 = vmatpush1.bf16.msra.mxu0 %v1311
  %1330 = vmatprep.subr.bf16.mxu0 0
  %1331 = vmatpush1.bf16.msra.mxu0 %v1312
  %1332 = vmatprep.subr.bf16.mxu0 0
  %1333 = vmatpush1.bf16.msra.mxu0 %v1313
  %1334 = vmatprep.subr.bf16.mxu0 0
  %1335 = vmatpush1.bf16.msra.mxu0 %v1314
  %1336 = vmatprep.subr.bf16.mxu0 0
  %1337 = vmatpush1.bf16.msra.mxu0 %v1315
  %1338 = vmatprep.subr.bf16.mxu0 0
  %1339 = vmatpush1.bf16.msra.mxu0 %v1316
  %1340 = vmatprep.subr.bf16.mxu0 0
  %1341 = vmatpush1.bf16.msra.mxu0 %v1317
  %1342 = vmatprep.subr.bf16.mxu0 0
  %1343 = vmatpush1.bf16.msra.mxu0 0
  %1344 = vmatprep.subr.bf16.mxu0 0
  %1345 = vmatpush1.bf16.msra.mxu0 0
  %1346 = vmatprep.subr.bf16.mxu0 0
  %1347 = vmatpush1.bf16.msra.mxu0 0
  %1348 = vmatprep.subr.bf16.mxu0 0
  %1349 = vmatpush1.bf16.msra.mxu0 0
  %1350 = vmatprep.subr.bf16.mxu0 0
  %1351 = vmatpush1.bf16.msra.mxu0 0
  %1352 = vmatprep.subr.bf16.mxu0 0
  %1353 = vmatpush1.bf16.msra.mxu0 0
  %1354 = vmatprep.subr.bf16.mxu0 0
  %1355 = vmatpush1.bf16.msra.mxu0 0
  %1356 = vmatprep.subr.bf16.mxu0 0
  %1357 = vmatpush1.bf16.msra.mxu0 0
  %1358 = vmatprep.mubr.bf16.mxu0 0
  %1359 = vmatmul.mubr.bf16.gmra.mrb[0].mxu0 %v1255
  %v1360 = vpop.f32.mrb[0].mxu0
  %v1361 = vadd.f32 %v1277, %v1360
  %v1362 = vpop.f32.mrb[0].mxu0
  %v1363 = vpop.f32.mrb[0].mxu0
  %v1364 = vpop.f32.mrb[0].mxu0
  %1365 = vdwg.mxu0
  %vm1366 = vcmp.lt.s32.totalorder %v1218, 32
  %1367 = vadd.xlane.f32.xlu0 %v1361
  %v1368 = vpop.xlane.xlu0 %1367
  %v1369 = vmul.f32 %v1368, 0.03125
  %v1370 = vsub.f32 %v1361, %v1369
  %v1371 = vsel %vm1366, 1, 0
  %vm1372 = vcmp.eq.s32.totalorder %v1371, 1
  %v1373 = vsel %vm1372, %v1370, 0.0
  %v1374 = vmul.f32 %v1373, %v1373
  %1375 = vadd.xlane.f32.xlu0 %v1374
  %v1376 = vpop.xlane.xlu0 %1375
  %v1377 = vmul.f32 %v1376, 0.03125
  %v1378 = vadd.f32 %v1377, 1e-05
  %v1379 = vrsqrt.pop %v1378
  %v1380 = vmul.f32 %v1373, %v1379
  %v1381 = vld [vmem:[%s6 + $0x8] sm:$0x1]
  %v1382 = vlaneseq
  %v1383 = vshrl.u32 %v1382, 7
  %v1384 = vsub.s32 0, %v1383
  %v1385 = vrot.slane %v1381, %v1384
  %v1386 = vmul.f32 %v1380, %v1385
  %v1387 = vld [vmem:[%s6 + $0x9] sm:$0x1]
  %v1388 = vlaneseq
  %v1389 = vshrl.u32 %v1388, 7
  %v1390 = vsub.s32 0, %v1389
  %v1391 = vrot.slane %v1387, %v1390
  %v1392 = vadd.f32 %v1386, %v1391
  %v1393 = vsub.f32 0.0, %v1392
  %v1394 = vmul.f32 %v1393, 1.442695
  %v1395 = vpow.pop %v1394
  %v1396 = vadd.f32 %v1395, 1.0
  %v1397 = vrcp.pop %v1396
  %v1398 = vmul.f32 %v1392, %v1397
  %s1399 = scalar_lea.vmem [#allocation2], 8
  %1400 = vst [vmem:[%s1399] sm:$0xff] %v1398
  %v1401 = vld [vmem:[%s876] sm:$0xff]
  %v1402 = vadd.f32 %v1398, %v1401
  %v1403 = vpack.c.bf16 %v1402, %v1402
  %s1404 = scalar_lea.vmem %s3, 384
  %v1405 = vld [vmem:[%s1404] sm:$0xf]
  %v1406 = vld [vmem:[%s1404 + $0x4] sm:$0xf]
  %v1407 = vld [vmem:[%s1404 + $0x8] sm:$0xf]
  %v1408 = vld [vmem:[%s1404 + $0xc] sm:$0xf]
  %v1409 = vld [vmem:[%s1404 + $0x10] sm:$0xf]
  %v1410 = vld [vmem:[%s1404 + $0x14] sm:$0xf]
  %v1411 = vld [vmem:[%s1404 + $0x18] sm:$0xf]
  %v1412 = vld [vmem:[%s1404 + $0x1c] sm:$0xf]
  %v1413 = vld [vmem:[%s1404 + $0x20] sm:$0xf]
  %v1414 = vld [vmem:[%s1404 + $0x24] sm:$0xf]
  %v1415 = vld [vmem:[%s1404 + $0x28] sm:$0xf]
  %v1416 = vld [vmem:[%s1404 + $0x2c] sm:$0xf]
  %v1417 = vld [vmem:[%s1404 + $0x30] sm:$0xf]
  %v1418 = vld [vmem:[%s1404 + $0x34] sm:$0xf]
  %v1419 = vld [vmem:[%s1404 + $0x38] sm:$0xf]
  %v1420 = vld [vmem:[%s1404 + $0x3c] sm:$0xf]
  %v1421 = vld [vmem:[%s6 + $0xa] sm:$0x1]
  %v1422 = vlaneseq
  %v1423 = vshrl.u32 %v1422, 7
  %v1424 = vsub.s32 0, %v1423
  %v1425 = vrot.slane %v1421, %v1424
  %v1442 = vunpack.c.l.b16 %v1405
  %v1443 = vunpack.c.l.b16 %v1406
  %v1444 = vunpack.c.l.b16 %v1407
  %v1445 = vunpack.c.l.b16 %v1408
  %v1446 = vunpack.c.l.b16 %v1409
  %v1447 = vunpack.c.l.b16 %v1410
  %v1448 = vunpack.c.l.b16 %v1411
  %v1449 = vunpack.c.l.b16 %v1412
  %v1450 = vunpack.c.l.b16 %v1413
  %v1451 = vunpack.c.l.b16 %v1414
  %v1452 = vunpack.c.l.b16 %v1415
  %v1453 = vunpack.c.l.b16 %v1416
  %v1454 = vunpack.c.l.b16 %v1417
  %v1455 = vunpack.c.l.b16 %v1418
  %v1456 = vunpack.c.l.b16 %v1419
  %v1457 = vunpack.c.l.b16 %v1420
  %v1458 = vpack.c.b16 %v1443, %v1442
  %v1459 = vpack.c.b16 %v1445, %v1444
  %v1460 = vpack.c.b16 %v1447, %v1446
  %v1461 = vpack.c.b16 %v1449, %v1448
  %v1462 = vpack.c.b16 %v1451, %v1450
  %v1463 = vpack.c.b16 %v1453, %v1452
  %v1464 = vpack.c.b16 %v1455, %v1454
  %v1465 = vpack.c.b16 %v1457, %v1456
  %1474 = vmatprep.subr.bf16.mxu0 0
  %1475 = vmatpush1.bf16.msra.mxu0 %v1458
  %1476 = vmatprep.subr.bf16.mxu0 0
  %1477 = vmatpush1.bf16.msra.mxu0 %v1459
  %1478 = vmatprep.subr.bf16.mxu0 0
  %1479 = vmatpush1.bf16.msra.mxu0 %v1460
  %1480 = vmatprep.subr.bf16.mxu0 0
  %1481 = vmatpush1.bf16.msra.mxu0 %v1461
  %1482 = vmatprep.subr.bf16.mxu0 0
  %1483 = vmatpush1.bf16.msra.mxu0 %v1462
  %1484 = vmatprep.subr.bf16.mxu0 0
  %1485 = vmatpush1.bf16.msra.mxu0 %v1463
  %1486 = vmatprep.subr.bf16.mxu0 0
  %1487 = vmatpush1.bf16.msra.mxu0 %v1464
  %1488 = vmatprep.subr.bf16.mxu0 0
  %1489 = vmatpush1.bf16.msra.mxu0 %v1465
  %1490 = vmatprep.subr.bf16.mxu0 0
  %1491 = vmatpush1.bf16.msra.mxu0 0
  %1492 = vmatprep.subr.bf16.mxu0 0
  %1493 = vmatpush1.bf16.msra.mxu0 0
  %1494 = vmatprep.subr.bf16.mxu0 0
  %1495 = vmatpush1.bf16.msra.mxu0 0
  %1496 = vmatprep.subr.bf16.mxu0 0
  %1497 = vmatpush1.bf16.msra.mxu0 0
  %1498 = vmatprep.subr.bf16.mxu0 0
  %1499 = vmatpush1.bf16.msra.mxu0 0
  %1500 = vmatprep.subr.bf16.mxu0 0
  %1501 = vmatpush1.bf16.msra.mxu0 0
  %1502 = vmatprep.subr.bf16.mxu0 0
  %1503 = vmatpush1.bf16.msra.mxu0 0
  %1504 = vmatprep.subr.bf16.mxu0 0
  %1505 = vmatpush1.bf16.msra.mxu0 0
  %1506 = vmatprep.mubr.bf16.mxu0 0
  %1507 = vmatmul.mubr.bf16.gmra.mrb[0].mxu0 %v1403
  %v1508 = vpop.f32.mrb[0].mxu0
  %v1509 = vadd.f32 %v1425, %v1508
  %v1510 = vpop.f32.mrb[0].mxu0
  %v1511 = vpop.f32.mrb[0].mxu0
  %v1512 = vpop.f32.mrb[0].mxu0
  %1513 = vdwg.mxu0
  %vm1514 = vcmp.lt.s32.totalorder %v1218, 16
  %1515 = vadd.xlane.f32.xlu0 %v1509
  %v1516 = vpop.xlane.xlu0 %1515
  %v1517 = vmul.f32 %v1516, 0.0625
  %v1518 = vsub.f32 %v1509, %v1517
  %v1519 = vsel %vm1514, 1, 0
  %vm1520 = vcmp.eq.s32.totalorder %v1519, 1
  %v1521 = vsel %vm1520, %v1518, 0.0
  %v1522 = vmul.f32 %v1521, %v1521
  %1523 = vadd.xlane.f32.xlu0 %v1522
  %v1524 = vpop.xlane.xlu0 %1523
  %v1525 = vmul.f32 %v1524, 0.0625
  %v1526 = vadd.f32 %v1525, 1e-05
  %v1527 = vrsqrt.pop %v1526
  %v1528 = vmul.f32 %v1521, %v1527
  %v1529 = vld [vmem:[%s6 + $0xb] sm:$0x1]
  %v1530 = vlaneseq
  %v1531 = vshrl.u32 %v1530, 7
  %v1532 = vsub.s32 0, %v1531
  %v1533 = vrot.slane %v1529, %v1532
  %v1534 = vmul.f32 %v1528, %v1533
  %v1535 = vld [vmem:[%s6 + $0xc] sm:$0x1]
  %v1536 = vlaneseq
  %v1537 = vshrl.u32 %v1536, 7
  %v1538 = vsub.s32 0, %v1537
  %v1539 = vrot.slane %v1535, %v1538
  %v1540 = vadd.f32 %v1534, %v1539
  %v1541 = vsub.f32 0.0, %v1540
  %v1542 = vmul.f32 %v1541, 1.442695
  %v1543 = vpow.pop %v1542
  %v1544 = vadd.f32 %v1543, 1.0
  %v1545 = vrcp.pop %v1544
  %v1546 = vmul.f32 %v1540, %v1545
  %v1547 = vld [vmem:[%s990] sm:$0xff]
  %v1548 = vadd.f32 %v1546, %v1547
  %v1549 = vpack.c.bf16 %v1548, %v1548
  %s1550 = scalar_lea.vmem %s3, 448
  %v1551 = vld [vmem:[%s1550] sm:$0xf]
  %v1552 = vld [vmem:[%s1550 + $0x4] sm:$0xf]
  %v1553 = vld [vmem:[%s1550 + $0x8] sm:$0xf]
  %v1554 = vld [vmem:[%s1550 + $0xc] sm:$0xf]
  %v1555 = vld [vmem:[%s1550 + $0x10] sm:$0xf]
  %v1556 = vld [vmem:[%s1550 + $0x14] sm:$0xf]
  %v1557 = vld [vmem:[%s1550 + $0x18] sm:$0xf]
  %v1558 = vld [vmem:[%s1550 + $0x1c] sm:$0xf]
  %v1559 = vld [vmem:[%s1550 + $0x20] sm:$0xf]
  %v1560 = vld [vmem:[%s1550 + $0x24] sm:$0xf]
  %v1561 = vld [vmem:[%s1550 + $0x28] sm:$0xf]
  %v1562 = vld [vmem:[%s1550 + $0x2c] sm:$0xf]
  %v1563 = vld [vmem:[%s1550 + $0x30] sm:$0xf]
  %v1564 = vld [vmem:[%s1550 + $0x34] sm:$0xf]
  %v1565 = vld [vmem:[%s1550 + $0x38] sm:$0xf]
  %v1566 = vld [vmem:[%s1550 + $0x3c] sm:$0xf]
  %v1567 = vld [vmem:[%s6 + $0xd] sm:$0x1]
  %v1568 = vlaneseq
  %v1569 = vshrl.u32 %v1568, 7
  %v1570 = vsub.s32 0, %v1569
  %v1571 = vrot.slane %v1567, %v1570
  %v1588 = vunpack.c.l.b16 %v1551
  %v1589 = vunpack.c.l.b16 %v1552
  %v1590 = vunpack.c.l.b16 %v1553
  %v1591 = vunpack.c.l.b16 %v1554
  %v1592 = vunpack.c.l.b16 %v1555
  %v1593 = vunpack.c.l.b16 %v1556
  %v1594 = vunpack.c.l.b16 %v1557
  %v1595 = vunpack.c.l.b16 %v1558
  %v1596 = vunpack.c.l.b16 %v1559
  %v1597 = vunpack.c.l.b16 %v1560
  %v1598 = vunpack.c.l.b16 %v1561
  %v1599 = vunpack.c.l.b16 %v1562
  %v1600 = vunpack.c.l.b16 %v1563
  %v1601 = vunpack.c.l.b16 %v1564
  %v1602 = vunpack.c.l.b16 %v1565
  %v1603 = vunpack.c.l.b16 %v1566
  %v1604 = vpack.c.b16 %v1589, %v1588
  %v1605 = vpack.c.b16 %v1591, %v1590
  %v1606 = vpack.c.b16 %v1593, %v1592
  %v1607 = vpack.c.b16 %v1595, %v1594
  %v1608 = vpack.c.b16 %v1597, %v1596
  %v1609 = vpack.c.b16 %v1599, %v1598
  %v1610 = vpack.c.b16 %v1601, %v1600
  %v1611 = vpack.c.b16 %v1603, %v1602
  %1620 = vmatprep.subr.bf16.mxu0 0
  %1621 = vmatpush1.bf16.msra.mxu0 %v1604
  %1622 = vmatprep.subr.bf16.mxu0 0
  %1623 = vmatpush1.bf16.msra.mxu0 %v1605
  %1624 = vmatprep.subr.bf16.mxu0 0
  %1625 = vmatpush1.bf16.msra.mxu0 %v1606
  %1626 = vmatprep.subr.bf16.mxu0 0
  %1627 = vmatpush1.bf16.msra.mxu0 %v1607
  %1628 = vmatprep.subr.bf16.mxu0 0
  %1629 = vmatpush1.bf16.msra.mxu0 %v1608
  %1630 = vmatprep.subr.bf16.mxu0 0
  %1631 = vmatpush1.bf16.msra.mxu0 %v1609
  %1632 = vmatprep.subr.bf16.mxu0 0
  %1633 = vmatpush1.bf16.msra.mxu0 %v1610
  %1634 = vmatprep.subr.bf16.mxu0 0
  %1635 = vmatpush1.bf16.msra.mxu0 %v1611
  %1636 = vmatprep.subr.bf16.mxu0 0
  %1637 = vmatpush1.bf16.msra.mxu0 0
  %1638 = vmatprep.subr.bf16.mxu0 0
  %1639 = vmatpush1.bf16.msra.mxu0 0
  %1640 = vmatprep.subr.bf16.mxu0 0
  %1641 = vmatpush1.bf16.msra.mxu0 0
  %1642 = vmatprep.subr.bf16.mxu0 0
  %1643 = vmatpush1.bf16.msra.mxu0 0
  %1644 = vmatprep.subr.bf16.mxu0 0
  %1645 = vmatpush1.bf16.msra.mxu0 0
  %1646 = vmatprep.subr.bf16.mxu0 0
  %1647 = vmatpush1.bf16.msra.mxu0 0
  %1648 = vmatprep.subr.bf16.mxu0 0
  %1649 = vmatpush1.bf16.msra.mxu0 0
  %1650 = vmatprep.subr.bf16.mxu0 0
  %1651 = vmatpush1.bf16.msra.mxu0 0
  %1652 = vmatprep.mubr.bf16.mxu0 0
  %1653 = vmatmul.mubr.bf16.gmra.mrb[0].mxu0 %v1549
  %v1654 = vpop.f32.mrb[0].mxu0
  %v1655 = vadd.f32 %v1571, %v1654
  %v1656 = vpop.f32.mrb[0].mxu0
  %v1657 = vpop.f32.mrb[0].mxu0
  %v1658 = vpop.f32.mrb[0].mxu0
  %1659 = vdwg.mxu0
  %1660 = vadd.xlane.f32.xlu0 %v1655
  %v1661 = vpop.xlane.xlu0 %1660
  %v1662 = vmul.f32 %v1661, 0.03125
  %v1663 = vsub.f32 %v1655, %v1662
  %v1664 = vsel %vm1372, %v1663, 0.0
  %v1665 = vmul.f32 %v1664, %v1664
  %1666 = vadd.xlane.f32.xlu0 %v1665
  %v1667 = vpop.xlane.xlu0 %1666
  %v1668 = vmul.f32 %v1667, 0.03125
  %v1669 = vadd.f32 %v1668, 1e-05
  %v1670 = vrsqrt.pop %v1669
  %v1671 = vmul.f32 %v1664, %v1670
  %v1672 = vld [vmem:[%s6 + $0xe] sm:$0x1]
  %v1673 = vlaneseq
  %v1674 = vshrl.u32 %v1673, 7
  %v1675 = vsub.s32 0, %v1674
  %v1676 = vrot.slane %v1672, %v1675
  %v1677 = vmul.f32 %v1671, %v1676
  %v1678 = vld [vmem:[%s6 + $0xf] sm:$0x1]
  %v1679 = vlaneseq
  %v1680 = vshrl.u32 %v1679, 7
  %v1681 = vsub.s32 0, %v1680
  %v1682 = vrot.slane %v1678, %v1681
  %v1683 = vadd.f32 %v1677, %v1682
  %v1684 = vsub.f32 0.0, %v1683
  %v1685 = vmul.f32 %v1684, 1.442695
  %v1686 = vpow.pop %v1685
  %v1687 = vadd.f32 %v1686, 1.0
  %v1688 = vrcp.pop %v1687
  %v1689 = vmul.f32 %v1683, %v1688
  %v1690 = vld [vmem:[%s1399] sm:$0xff]
  %v1691 = vadd.f32 %v1689, %v1690
  %v1692 = vld [vmem:[%s1104] sm:$0xff]
  %v1693 = vadd.f32 %v1691, %v1692
  %v1694 = vpack.c.bf16 %v1693, %v1693
  %s1695 = scalar_lea.vmem %s3, 512
  %v1696 = vld [vmem:[%s1695] sm:$0xf]
  %v1697 = vld [vmem:[%s1695 + $0x4] sm:$0xf]
  %v1698 = vld [vmem:[%s1695 + $0x8] sm:$0xf]
  %v1699 = vld [vmem:[%s1695 + $0xc] sm:$0xf]
  %v1700 = vld [vmem:[%s1695 + $0x10] sm:$0xf]
  %v1701 = vld [vmem:[%s1695 + $0x14] sm:$0xf]
  %v1702 = vld [vmem:[%s1695 + $0x18] sm:$0xf]
  %v1703 = vld [vmem:[%s1695 + $0x1c] sm:$0xf]
  %v1704 = vld [vmem:[%s1695 + $0x20] sm:$0xf]
  %v1705 = vld [vmem:[%s1695 + $0x24] sm:$0xf]
  %v1706 = vld [vmem:[%s1695 + $0x28] sm:$0xf]
  %v1707 = vld [vmem:[%s1695 + $0x2c] sm:$0xf]
  %v1708 = vld [vmem:[%s1695 + $0x30] sm:$0xf]
  %v1709 = vld [vmem:[%s1695 + $0x34] sm:$0xf]
  %v1710 = vld [vmem:[%s1695 + $0x38] sm:$0xf]
  %v1711 = vld [vmem:[%s1695 + $0x3c] sm:$0xf]
  %v1712 = vld [vmem:[%s6 + $0x10] sm:$0x1]
  %v1713 = vlaneseq
  %v1714 = vshrl.u32 %v1713, 7
  %v1715 = vsub.s32 0, %v1714
  %v1716 = vrot.slane %v1712, %v1715
  %v1733 = vunpack.c.l.b16 %v1696
  %v1734 = vunpack.c.l.b16 %v1697
  %v1735 = vunpack.c.l.b16 %v1698
  %v1736 = vunpack.c.l.b16 %v1699
  %v1737 = vunpack.c.l.b16 %v1700
  %v1738 = vunpack.c.l.b16 %v1701
  %v1739 = vunpack.c.l.b16 %v1702
  %v1740 = vunpack.c.l.b16 %v1703
  %v1741 = vunpack.c.l.b16 %v1704
  %v1742 = vunpack.c.l.b16 %v1705
  %v1743 = vunpack.c.l.b16 %v1706
  %v1744 = vunpack.c.l.b16 %v1707
  %v1745 = vunpack.c.l.b16 %v1708
  %v1746 = vunpack.c.l.b16 %v1709
  %v1747 = vunpack.c.l.b16 %v1710
  %v1748 = vunpack.c.l.b16 %v1711
  %v1749 = vpack.c.b16 %v1734, %v1733
  %v1750 = vpack.c.b16 %v1736, %v1735
  %v1751 = vpack.c.b16 %v1738, %v1737
  %v1752 = vpack.c.b16 %v1740, %v1739
  %v1753 = vpack.c.b16 %v1742, %v1741
  %v1754 = vpack.c.b16 %v1744, %v1743
  %v1755 = vpack.c.b16 %v1746, %v1745
  %v1756 = vpack.c.b16 %v1748, %v1747
  %1765 = vmatprep.subr.bf16.mxu0 0
  %1766 = vmatpush1.bf16.msra.mxu0 %v1749
  %1767 = vmatprep.subr.bf16.mxu0 0
  %1768 = vmatpush1.bf16.msra.mxu0 %v1750
  %1769 = vmatprep.subr.bf16.mxu0 0
  %1770 = vmatpush1.bf16.msra.mxu0 %v1751
  %1771 = vmatprep.subr.bf16.mxu0 0
  %1772 = vmatpush1.bf16.msra.mxu0 %v1752
  %1773 = vmatprep.subr.bf16.mxu0 0
  %1774 = vmatpush1.bf16.msra.mxu0 %v1753
  %1775 = vmatprep.subr.bf16.mxu0 0
  %1776 = vmatpush1.bf16.msra.mxu0 %v1754
  %1777 = vmatprep.subr.bf16.mxu0 0
  %1778 = vmatpush1.bf16.msra.mxu0 %v1755
  %1779 = vmatprep.subr.bf16.mxu0 0
  %1780 = vmatpush1.bf16.msra.mxu0 %v1756
  %1781 = vmatprep.subr.bf16.mxu0 0
  %1782 = vmatpush1.bf16.msra.mxu0 0
  %1783 = vmatprep.subr.bf16.mxu0 0
  %1784 = vmatpush1.bf16.msra.mxu0 0
  %1785 = vmatprep.subr.bf16.mxu0 0
  %1786 = vmatpush1.bf16.msra.mxu0 0
  %1787 = vmatprep.subr.bf16.mxu0 0
  %1788 = vmatpush1.bf16.msra.mxu0 0
  %1789 = vmatprep.subr.bf16.mxu0 0
  %1790 = vmatpush1.bf16.msra.mxu0 0
  %1791 = vmatprep.subr.bf16.mxu0 0
  %1792 = vmatpush1.bf16.msra.mxu0 0
  %1793 = vmatprep.subr.bf16.mxu0 0
  %1794 = vmatpush1.bf16.msra.mxu0 0
  %1795 = vmatprep.subr.bf16.mxu0 0
  %1796 = vmatpush1.bf16.msra.mxu0 0
  %1797 = vmatprep.mubr.bf16.mxu0 0
  %1798 = vmatmul.mubr.bf16.gmra.mrb[0].mxu0 %v1694
  %v1799 = vpop.f32.mrb[0].mxu0
  %v1800 = vadd.f32 %v1716, %v1799
  %v1801 = vpop.f32.mrb[0].mxu0
  %v1802 = vpop.f32.mrb[0].mxu0
  %v1803 = vpop.f32.mrb[0].mxu0
  %1804 = vdwg.mxu0
  %1805 = vadd.xlane.f32.xlu0 %v1800
  %v1806 = vpop.xlane.xlu0 %1805
  %v1807 = vmul.f32 %v1806, 0.015625
  %v1808 = vsub.f32 %v1800, %v1807
  %v1809 = vsel %vm1225, %v1808, 0.0
  %v1810 = vmul.f32 %v1809, %v1809
  %1811 = vadd.xlane.f32.xlu0 %v1810
  %v1812 = vpop.xlane.xlu0 %1811
  %v1813 = vmul.f32 %v1812, 0.015625
  %v1814 = vadd.f32 %v1813, 1e-05
  %v1815 = vrsqrt.pop %v1814
  %v1816 = vmul.f32 %v1809, %v1815
  %v1817 = vld [vmem:[%s6 + $0x11] sm:$0x1]
  %v1818 = vlaneseq
  %v1819 = vshrl.u32 %v1818, 7
  %v1820 = vsub.s32 0, %v1819
  %v1821 = vrot.slane %v1817, %v1820
  %v1822 = vmul.f32 %v1816, %v1821
  %v1823 = vld [vmem:[%s6 + $0x12] sm:$0x1]
  %v1824 = vlaneseq
  %v1825 = vshrl.u32 %v1824, 7
  %v1826 = vsub.s32 0, %v1825
  %v1827 = vrot.slane %v1823, %v1826
  %v1828 = vadd.f32 %v1822, %v1827
  %v1829 = vsub.f32 0.0, %v1828
  %v1830 = vmul.f32 %v1829, 1.442695
  %v1831 = vpow.pop %v1830
  %v1832 = vadd.f32 %v1831, 1.0
  %v1833 = vrcp.pop %v1832
  %v1834 = vmul.f32 %v1828, %v1833
  %v1835 = vld [vmem:[#allocation2] sm:$0xff]
  %v1836 = vadd.f32 %v1834, %v1835
  %v1837 = vpack.c.bf16 %v1836, %v1836
  %s1838 = scalar_lea.vmem %s3, 576
  %v1839 = vld [vmem:[%s1838] sm:$0xf]
  %v1840 = vld [vmem:[%s1838 + $0x4] sm:$0xf]
  %v1841 = vld [vmem:[%s1838 + $0x8] sm:$0xf]
  %v1842 = vld [vmem:[%s1838 + $0xc] sm:$0xf]
  %v1843 = vld [vmem:[%s1838 + $0x10] sm:$0xf]
  %v1844 = vld [vmem:[%s1838 + $0x14] sm:$0xf]
  %v1845 = vld [vmem:[%s1838 + $0x18] sm:$0xf]
  %v1846 = vld [vmem:[%s1838 + $0x1c] sm:$0xf]
  %v1847 = vld [vmem:[%s1838 + $0x20] sm:$0xf]
  %v1848 = vld [vmem:[%s1838 + $0x24] sm:$0xf]
  %v1849 = vld [vmem:[%s1838 + $0x28] sm:$0xf]
  %v1850 = vld [vmem:[%s1838 + $0x2c] sm:$0xf]
  %v1851 = vld [vmem:[%s1838 + $0x30] sm:$0xf]
  %v1852 = vld [vmem:[%s1838 + $0x34] sm:$0xf]
  %v1853 = vld [vmem:[%s1838 + $0x38] sm:$0xf]
  %v1854 = vld [vmem:[%s1838 + $0x3c] sm:$0xf]
  %v1855 = vld [vmem:[%s6 + $0x13] sm:$0x1]
  %v1856 = vlaneseq
  %v1857 = vshrl.u32 %v1856, 7
  %v1858 = vsub.s32 0, %v1857
  %v1859 = vrot.slane %v1855, %v1858
  %v1876 = vunpack.c.l.b16 %v1839
  %v1877 = vunpack.c.l.b16 %v1840
  %v1878 = vunpack.c.l.b16 %v1841
  %v1879 = vunpack.c.l.b16 %v1842
  %v1880 = vunpack.c.l.b16 %v1843
  %v1881 = vunpack.c.l.b16 %v1844
  %v1882 = vunpack.c.l.b16 %v1845
  %v1883 = vunpack.c.l.b16 %v1846
  %v1884 = vunpack.c.l.b16 %v1847
  %v1885 = vunpack.c.l.b16 %v1848
  %v1886 = vunpack.c.l.b16 %v1849
  %v1887 = vunpack.c.l.b16 %v1850
  %v1888 = vunpack.c.l.b16 %v1851
  %v1889 = vunpack.c.l.b16 %v1852
  %v1890 = vunpack.c.l.b16 %v1853
  %v1891 = vunpack.c.l.b16 %v1854
  %v1892 = vpack.c.b16 %v1877, %v1876
  %v1893 = vpack.c.b16 %v1879, %v1878
  %v1894 = vpack.c.b16 %v1881, %v1880
  %v1895 = vpack.c.b16 %v1883, %v1882
  %v1896 = vpack.c.b16 %v1885, %v1884
  %v1897 = vpack.c.b16 %v1887, %v1886
  %v1898 = vpack.c.b16 %v1889, %v1888
  %v1899 = vpack.c.b16 %v1891, %v1890
  %1908 = vmatprep.subr.bf16.mxu0 0
  %1909 = vmatpush1.bf16.msra.mxu0 %v1892
  %1910 = vmatprep.subr.bf16.mxu0 0
  %1911 = vmatpush1.bf16.msra.mxu0 %v1893
  %1912 = vmatprep.subr.bf16.mxu0 0
  %1913 = vmatpush1.bf16.msra.mxu0 %v1894
  %1914 = vmatprep.subr.bf16.mxu0 0
  %1915 = vmatpush1.bf16.msra.mxu0 %v1895
  %1916 = vmatprep.subr.bf16.mxu0 0
  %1917 = vmatpush1.bf16.msra.mxu0 %v1896
  %1918 = vmatprep.subr.bf16.mxu0 0
  %1919 = vmatpush1.bf16.msra.mxu0 %v1897
  %1920 = vmatprep.subr.bf16.mxu0 0
  %1921 = vmatpush1.bf16.msra.mxu0 %v1898
  %1922 = vmatprep.subr.bf16.mxu0 0
  %1923 = vmatpush1.bf16.msra.mxu0 %v1899
  %1924 = vmatprep.subr.bf16.mxu0 0
  %1925 = vmatpush1.bf16.msra.mxu0 0
  %1926 = vmatprep.subr.bf16.mxu0 0
  %1927 = vmatpush1.bf16.msra.mxu0 0
  %1928 = vmatprep.subr.bf16.mxu0 0
  %1929 = vmatpush1.bf16.msra.mxu0 0
  %1930 = vmatprep.subr.bf16.mxu0 0
  %1931 = vmatpush1.bf16.msra.mxu0 0
  %1932 = vmatprep.subr.bf16.mxu0 0
  %1933 = vmatpush1.bf16.msra.mxu0 0
  %1934 = vmatprep.subr.bf16.mxu0 0
  %1935 = vmatpush1.bf16.msra.mxu0 0
  %1936 = vmatprep.subr.bf16.mxu0 0
  %1937 = vmatpush1.bf16.msra.mxu0 0
  %1938 = vmatprep.subr.bf16.mxu0 0
  %1939 = vmatpush1.bf16.msra.mxu0 0
  %1940 = vmatprep.mubr.bf16.mxu0 0
  %1941 = vmatmul.mubr.bf16.gmra.mrb[0].mxu0 %v1837
  %v1942 = vpop.f32.mrb[0].mxu0
  %v1943 = vadd.f32 %v1859, %v1942
  %v1944 = vpop.f32.mrb[0].mxu0
  %v1945 = vpop.f32.mrb[0].mxu0
  %v1946 = vpop.f32.mrb[0].mxu0
  %1947 = vdwg.mxu0
  %1948 = vst [vmem:[%s8] sm:$0xff] %v1943
  // Predicated region
  $region34: #{diffusion_prior_unet_forward.1} parent=0 // pred_check
    _
  $region35: #{diffusion_prior_unet_forward.1} parent=0 // pred_check_branch
    %1950 = sbr.rel (0) target = $region37
  $region36: #{diffusion_prior_unet_forward.1} parent=0 // pred_region
    _
  $region37: #{diffusion_prior_unet_forward.1} parent=0 // pred_fallthru
    _
  // Predicated region
  $region38: #{diffusion_prior_unet_forward.1} parent=0 // pred_check
    _
  $region39: #{diffusion_prior_unet_forward.1} parent=0 // pred_check_branch
    %1952 = sbr.rel (0) target = $region41
  $region40: #{diffusion_prior_unet_forward.1} parent=0 // pred_region
    _
  $region41: #{diffusion_prior_unet_forward.1} parent=0 // pred_fallthru
    _

</llo_original>
